<compile_context>
chip_gen: v7x
topology: tpu7x:2x2x1
jax: 0.10.0
libtpu: 0.0.40
codegen_flags: <defaults>
</compile_context>

<pallas_src>
import functools
import math

import jax
import jax.numpy as jnp
from jax.experimental import pallas as pl
from jax.experimental.pallas import tpu as pltpu  # noqa: F401  (TPU backend)


# ----------------------------------------------------------------------------
# Single fused kernel: backbone + head, all batches, one launch.
# ----------------------------------------------------------------------------
def _fused_kernel(x_ref, sprev_ref, snext_ref,
                  w_pre_ref, b_pre_ref, w_dw_ref, b_dw_ref, w_pw_ref, b_pw_ref,
                  w_proj_ref, b_proj_ref,
                  w_comb_h_ref, w_comb_p_ref, b_comb_ref,
                  w_in_ref, b_in_ref, w_out_ref, b_out_ref,
                  w_ff1_ref, b_ff1_ref, w_ff2_ref, b_ff2_ref,
                  ln_g_ref, ln_b_ref,
                  w_enh_ref, b_enh_ref,
                  w_att1_ref, b_att1_ref, w_att2_ref, b_att2_ref,
                  w_fc_ref, b_fc_ref,
                  o_ref, *, num_heads, mm_dtype):
    x = x_ref[...]                                        # (B, T, M) f32
    B, T, M = x.shape
    BT = B * T

    def mm(a, b):                                         # bf16 MXU, f32 accum
        return jnp.dot(a.astype(mm_dtype), b.astype(mm_dtype),
                       preferred_element_type=jnp.float32)

    # ---- per-sample normalization: (x - mean) / (std + 1e-5), unbiased std
    def _sum_tm(v):                                       # sum over (T, M), keepdims
        return jnp.sum(jnp.sum(v, axis=2, keepdims=True), axis=1, keepdims=True)

    n = T * M
    mean = _sum_tm(x) * (1.0 / n)
    var = _sum_tm((x - mean) ** 2) * (1.0 / (n - 1))      # torch.std: unbiased
    xn = (x - mean) / (jnp.sqrt(var) + 1e-5)
    xf = xn.reshape(BT, M)                                # flattened rows

    # ---- simplified MatchboxNetSkip: pointwise(M->C)+ReLU, depthwise k=3
    #      'same' along T (±1 shift matrices on the MXU), pointwise+skip+ReLU
    h0 = jnp.maximum(mm(xf, w_pre_ref[...]) + b_pre_ref[...], 0.0)      # (BT, C)
    h_prev = jnp.dot(sprev_ref[...], h0, preferred_element_type=jnp.float32)
    h_next = jnp.dot(snext_ref[...], h0, preferred_element_type=jnp.float32)
    wdw = w_dw_ref[...]                                   # (3, C)
    h1 = (wdw[0:1, :] * h_prev + wdw[1:2, :] * h0 + wdw[2:3, :] * h_next
          + b_dw_ref[...])
    h2 = jnp.maximum(mm(h1, w_pw_ref[...]) + b_pw_ref[...] + h0, 0.0)   # (BT, C)

    # ---- input_projection: Linear(C -> H)
    H = w_proj_ref.shape[1]
    hd = H // num_heads
    scale = 1.0 / math.sqrt(hd)
    p = mm(h2, w_proj_ref[...]) + b_proj_ref[...]                        # (BT, H)

    # ---- positional feature t/T + Linear(H+1 -> H), expressed without concat
    pos = (jax.lax.broadcasted_iota(jnp.int32, (B, T, 1), 1)
           .astype(jnp.float32).reshape(BT, 1)) * (1.0 / T)
    h = mm(p, w_comb_h_ref[...]) + pos * w_comb_p_ref[...] + b_comb_ref[...]

    # ---- multi-head self-attention (q = k = v = h), dropout = identity.
    #      Per-head score/context (tiny, batch-dim einsums) but a SINGLE
    #      out-projection of the concatenated contexts.
    qkv = mm(h, w_in_ref[...]) + b_in_ref[...]                           # (BT, 3H)
    q3 = qkv[:, 0:H].reshape(B, T, H)
    k3 = qkv[:, H:2 * H].reshape(B, T, H)
    v3 = qkv[:, 2 * H:3 * H].reshape(B, T, H)
    ctxs = []
    for hh in range(num_heads):                           # static unroll (2)
        lo = hh * hd
        qh = q3[:, :, lo:lo + hd].astype(mm_dtype)
        kh = k3[:, :, lo:lo + hd].astype(mm_dtype)
        vh = v3[:, :, lo:lo + hd].astype(mm_dtype)
        s = jnp.einsum("bqd,bkd->bqk", qh, kh,
                       preferred_element_type=jnp.float32) * scale
        s = s - jnp.max(s, axis=-1, keepdims=True)
        e = jnp.exp(s)
        a = e * pl.reciprocal(jnp.sum(e, axis=-1, keepdims=True), approx=True)
        ctxs.append(jnp.einsum("bqk,bkd->bqd", a.astype(mm_dtype), vh,
                               preferred_element_type=jnp.float32))
    ctx = jnp.concatenate(ctxs, axis=-1).reshape(BT, H)
    x1 = h + mm(ctx, w_out_ref[...]) + b_out_ref[...]     # residual + out-proj

    # ---- feed-forward + residual
    f = jnp.maximum(mm(x1, w_ff1_ref[...]) + b_ff1_ref[...], 0.0)
    x2 = x1 + mm(f, w_ff2_ref[...]) + b_ff2_ref[...]

    # ---- LayerNorm(H), f32
    mu = jnp.mean(x2, axis=-1, keepdims=True)
    var2 = jnp.mean((x2 - mu) ** 2, axis=-1, keepdims=True)
    x3 = (x2 - mu) * jax.lax.rsqrt(var2 + 1e-5) * ln_g_ref[...] + ln_b_ref[...]

    # ---- LightConsonantEnhancer (simplified residual sigmoid gate)
    gate = jax.nn.sigmoid(mm(x3, w_enh_ref[...]) + b_enh_ref[...])
    x4 = x3 + x3 * gate

    # ---- FocusedAttention pooling (Linear -> tanh -> score, softmax over T)
    a1 = jnp.tanh(mm(x4, w_att1_ref[...]) + b_att1_ref[...])             # (BT, H)
    a1_3d = a1.reshape(B, T, H)
    x4_3d = x4.reshape(B, T, H)
    s3 = jnp.sum(a1_3d * w_att2_ref[...], axis=-1, keepdims=True) + b_att2_ref[...]
    s3 = s3 - jnp.max(s3, axis=1, keepdims=True)
    e3 = jnp.exp(s3)
    w3 = e3 * pl.reciprocal(jnp.sum(e3, axis=1, keepdims=True), approx=True)
    ctx2 = jnp.sum(w3 * x4_3d, axis=1)                                   # (B, H)

    # ---- dropout (identity) + fc2 -> lane-sparse final (B, num_classes) store
    o_ref[...] = mm(ctx2, w_fc_ref[...]) + b_fc_ref[...]


_PARAM_ORDER = (
    "w_pre", "b_pre", "w_dw", "b_dw", "w_pw", "b_pw",
    "w_proj", "b_proj",
    "w_comb_h", "w_comb_p", "b_comb",
    "w_in", "b_in", "w_out", "b_out",
    "w_ff1", "b_ff1", "w_ff2", "b_ff2",
    "ln_g", "ln_b",
    "w_enh", "b_enh",
    "w_att1", "b_att1", "w_att2", "b_att2",
    "w_fc", "b_fc",
)


# ----------------------------------------------------------------------------
# Parameter init + forward
# ----------------------------------------------------------------------------
def init_params(key, *, num_classes=10, n_mel_bins=64, hidden_dim=32,
                phi_channels=64):
    H, M, C = hidden_dim, n_mel_bins, phi_channels
    ks = iter(jax.random.split(key, 40))

    def u(shape, fan_in):
        s = 1.0 / math.sqrt(fan_in)
        return jax.random.uniform(next(ks), shape, jnp.float32, -s, s)

    return {
        # phi = MatchboxNetSkip (simplified). Layouts are stored kernel-ready
        # (contracting dim first) to avoid transposes.
        "w_pre": u((M, C), M), "b_pre": u((1, C), M),
        "w_dw":  u((3, C), 3), "b_dw":  u((1, C), 3),
        "w_pw":  u((C, C), C), "b_pw":  u((1, C), C),
        # input_projection: Linear(C=64 -> H)
        "w_proj": u((C, H), C), "b_proj": u((1, H), C),
        # Linear(H+1 -> H) applied to [x, positions]
        "w_comb_h": u((H, H), H + 1), "w_comb_p": u((1, H), H + 1),
        "b_comb": u((1, H), H + 1),
        # MultiheadAttention in-proj (q,k,v packed) and out-proj
        "w_in": u((H, 3 * H), H), "b_in": u((1, 3 * H), H),
        "w_out": u((H, H), H), "b_out": u((1, H), H),
        # feed_forward: Linear(H,2H) -> ReLU -> Linear(2H,H)
        "w_ff1": u((H, 2 * H), H), "b_ff1": u((1, 2 * H), H),
        "w_ff2": u((2 * H, H), 2 * H), "b_ff2": u((1, H), 2 * H),
        # LayerNorm(H)
        "ln_g": jnp.ones((1, H), jnp.float32),
        "ln_b": jnp.zeros((1, H), jnp.float32),
        # LightConsonantEnhancer (simplified gate)
        "w_enh": u((H, H), H), "b_enh": u((1, H), H),
        # FocusedAttention (simplified pooling)
        "w_att1": u((H, H), H), "b_att1": u((1, H), H),
        "w_att2": u((1, H), H), "b_att2": u((1, 1), H),
        # fc2
        "w_fc": u((H, num_classes), H), "b_fc": u((1, num_classes), H),
    }


@functools.partial(jax.jit, static_argnames=("num_heads",))
def forward(params, x, *, num_heads=2):
    # TODO(synk): MelSpectrogram + AmplitudeToDB skipped; x is the mel-dB
    # spectrogram, shape (B, 1, n_mel, T) or (B, n_mel, T).
    if x.ndim == 4 and x.shape[1] == 1:
        x = x[:, 0]                                       # (B, M, T)
    x_btm = jnp.swapaxes(x, 1, 2)                         # (B, T, M): matmul-ready
    B, T, M = x_btm.shape
    num_classes = params["w_fc"].shape[1]

    # Batch-blocked ±1 shift matrices for the depthwise k=3 'same' halo.
    # Compile-time constants (shapes are static), applied on the MXU in-kernel.
    idx = jnp.arange(B * T)
    same = (idx[:, None] // T) == (idx[None, :] // T)
    s_prev = ((idx[None, :] == idx[:, None] - 1) & same).astype(jnp.float32)
    s_next = ((idx[None, :] == idx[:, None] + 1) & same).astype(jnp.float32)

    args = [x_btm, s_prev, s_next] + [params[k] for k in _PARAM_ORDER]
    return pl.pallas_call(
        functools.partial(_fused_kernel, num_heads=num_heads,
                          mm_dtype=jnp.bfloat16),
        out_shape=jax.ShapeDtypeStruct((B, num_classes), jnp.float32),
    )(*args)


if __name__ == "__main__":
    B, n_mel, T = 2, 64, 16
    hidden_dim, num_classes, num_heads = 32, 10, 2

    key = jax.random.PRNGKey(0)
    k_x, k_p = jax.random.split(key)
    x = jax.random.normal(k_x, (B, 1, n_mel, T), dtype=jnp.float32)
    params = init_params(k_p, num_classes=num_classes, n_mel_bins=n_mel,
                         hidden_dim=hidden_dim, phi_channels=64)

    logits = forward(params, x, num_heads=num_heads)
    jax.block_until_ready(logits)
    assert logits.shape == (B, num_classes)
    print("KERNEL_OK")
</pallas_src>

<mosaic_0001>
module attributes {stable_mosaic.version = 11 : i64} {
  func.func @_fused_kernel(%arg0: memref<2x16x64xf32, #tpu.memory_space<vmem>>, %arg1: memref<32x32xf32, #tpu.memory_space<vmem>>, %arg2: memref<32x32xf32, #tpu.memory_space<vmem>>, %arg3: memref<64x64xf32, #tpu.memory_space<vmem>>, %arg4: memref<1x64xf32, #tpu.memory_space<vmem>>, %arg5: memref<3x64xf32, #tpu.memory_space<vmem>>, %arg6: memref<1x64xf32, #tpu.memory_space<vmem>>, %arg7: memref<64x64xf32, #tpu.memory_space<vmem>>, %arg8: memref<1x64xf32, #tpu.memory_space<vmem>>, %arg9: memref<64x32xf32, #tpu.memory_space<vmem>>, %arg10: memref<1x32xf32, #tpu.memory_space<vmem>>, %arg11: memref<32x32xf32, #tpu.memory_space<vmem>>, %arg12: memref<1x32xf32, #tpu.memory_space<vmem>>, %arg13: memref<1x32xf32, #tpu.memory_space<vmem>>, %arg14: memref<32x96xf32, #tpu.memory_space<vmem>>, %arg15: memref<1x96xf32, #tpu.memory_space<vmem>>, %arg16: memref<32x32xf32, #tpu.memory_space<vmem>>, %arg17: memref<1x32xf32, #tpu.memory_space<vmem>>, %arg18: memref<32x64xf32, #tpu.memory_space<vmem>>, %arg19: memref<1x64xf32, #tpu.memory_space<vmem>>, %arg20: memref<64x32xf32, #tpu.memory_space<vmem>>, %arg21: memref<1x32xf32, #tpu.memory_space<vmem>>, %arg22: memref<1x32xf32, #tpu.memory_space<vmem>>, %arg23: memref<1x32xf32, #tpu.memory_space<vmem>>, %arg24: memref<32x32xf32, #tpu.memory_space<vmem>>, %arg25: memref<1x32xf32, #tpu.memory_space<vmem>>, %arg26: memref<32x32xf32, #tpu.memory_space<vmem>>, %arg27: memref<1x32xf32, #tpu.memory_space<vmem>>, %arg28: memref<1x32xf32, #tpu.memory_space<vmem>>, %arg29: memref<1x1xf32, #tpu.memory_space<vmem>>, %arg30: memref<32x10xf32, #tpu.memory_space<vmem>>, %arg31: memref<1x10xf32, #tpu.memory_space<vmem>>, %arg32: memref<2x10xf32, #tpu.memory_space<vmem>>) attributes {dimension_semantics = [], scalar_prefetch = 0 : i64, scratch_operands = 0 : i64, tpu.core_type = #tpu.core_type<tc>} {
    %c0 = arith.constant 0 : index
    %c0_0 = arith.constant 0 : index
    %c0_1 = arith.constant 0 : index
    %0 = vector.load %arg0[%c0, %c0_0, %c0_1] : memref<2x16x64xf32, #tpu.memory_space<vmem>>, vector<2x16x64xf32>
    %cst = arith.constant dense<0.000000e+00> : vector<2x16xf32>
    %1 = vector.multi_reduction <add>, %0, %cst [2] : vector<2x16x64xf32> to vector<2x16xf32>
    %2 = vector.shape_cast %1 : vector<2x16xf32> to vector<2x16x1xf32>
    %cst_2 = arith.constant dense<0.000000e+00> : vector<2x1xf32>
    %3 = vector.multi_reduction <add>, %2, %cst_2 [1] : vector<2x16x1xf32> to vector<2x1xf32>
    %4 = vector.shape_cast %3 : vector<2x1xf32> to vector<2x1x1xf32>
    %cst_3 = arith.constant 9.765625E-4 : f32
    %5 = vector.broadcast %cst_3 : f32 to vector<2x1x1xf32>
    %6 = arith.mulf %4, %5 : vector<2x1x1xf32>
    %7 = vector.broadcast %6 : vector<2x1x1xf32> to vector<2x16x64xf32>
    %8 = arith.subf %0, %7 : vector<2x16x64xf32>
    %9 = arith.mulf %8, %8 : vector<2x16x64xf32>
    %cst_4 = arith.constant dense<0.000000e+00> : vector<2x16xf32>
    %10 = vector.multi_reduction <add>, %9, %cst_4 [2] : vector<2x16x64xf32> to vector<2x16xf32>
    %11 = vector.shape_cast %10 : vector<2x16xf32> to vector<2x16x1xf32>
    %cst_5 = arith.constant dense<0.000000e+00> : vector<2x1xf32>
    %12 = vector.multi_reduction <add>, %11, %cst_5 [1] : vector<2x16x1xf32> to vector<2x1xf32>
    %13 = vector.shape_cast %12 : vector<2x1xf32> to vector<2x1x1xf32>
    %cst_6 = arith.constant 9.77517105E-4 : f32
    %14 = vector.broadcast %cst_6 : f32 to vector<2x1x1xf32>
    %15 = arith.mulf %13, %14 : vector<2x1x1xf32>
    %16 = vector.broadcast %6 : vector<2x1x1xf32> to vector<2x16x64xf32>
    %17 = arith.subf %0, %16 : vector<2x16x64xf32>
    %18 = math.sqrt %15 : vector<2x1x1xf32>
    %cst_7 = arith.constant 9.99999974E-6 : f32
    %19 = vector.broadcast %cst_7 : f32 to vector<2x1x1xf32>
    %20 = arith.addf %18, %19 : vector<2x1x1xf32>
    %21 = vector.broadcast %20 : vector<2x1x1xf32> to vector<2x16x64xf32>
    %22 = arith.divf %17, %21 : vector<2x16x64xf32>
    %23 = vector.shape_cast %22 : vector<2x16x64xf32> to vector<32x64xf32>
    %c0_8 = arith.constant 0 : index
    %c0_9 = arith.constant 0 : index
    %24 = vector.load %arg3[%c0_8, %c0_9] : memref<64x64xf32, #tpu.memory_space<vmem>>, vector<64x64xf32>
    %25 = arith.truncf %23 : vector<32x64xf32> to vector<32x64xbf16>
    %26 = arith.truncf %24 : vector<64x64xf32> to vector<64x64xbf16>
    %cst_10 = arith.constant dense<0.000000e+00> : vector<32x64xf32>
    %27 = tpu.matmul %25, %26, %cst_10 {dimension_numbers = #tpu.dot_dimension_numbers<[1], [0], [0], [1], [0, 0, 1, 1], [], []>} : vector<32x64xbf16>, vector<64x64xbf16>, vector<32x64xf32> -> vector<32x64xf32>
    %c0_11 = arith.constant 0 : index
    %c0_12 = arith.constant 0 : index
    %28 = vector.load %arg4[%c0_11, %c0_12] : memref<1x64xf32, #tpu.memory_space<vmem>>, vector<1x64xf32>
    %29 = vector.broadcast %28 : vector<1x64xf32> to vector<32x64xf32>
    %30 = arith.addf %27, %29 : vector<32x64xf32>
    %cst_13 = arith.constant 0.000000e+00 : f32
    %31 = vector.broadcast %cst_13 : f32 to vector<32x64xf32>
    %32 = arith.maximumf %30, %31 : vector<32x64xf32>
    %c0_14 = arith.constant 0 : index
    %c0_15 = arith.constant 0 : index
    %33 = vector.load %arg1[%c0_14, %c0_15] : memref<32x32xf32, #tpu.memory_space<vmem>>, vector<32x32xf32>
    %cst_16 = arith.constant dense<0.000000e+00> : vector<32x64xf32>
    %34 = tpu.matmul %33, %32, %cst_16 {dimension_numbers = #tpu.dot_dimension_numbers<[1], [0], [0], [1], [0, 0, 1, 1], [], []>} : vector<32x32xf32>, vector<32x64xf32>, vector<32x64xf32> -> vector<32x64xf32>
    %c0_17 = arith.constant 0 : index
    %c0_18 = arith.constant 0 : index
    %35 = vector.load %arg2[%c0_17, %c0_18] : memref<32x32xf32, #tpu.memory_space<vmem>>, vector<32x32xf32>
    %cst_19 = arith.constant dense<0.000000e+00> : vector<32x64xf32>
    %36 = tpu.matmul %35, %32, %cst_19 {dimension_numbers = #tpu.dot_dimension_numbers<[1], [0], [0], [1], [0, 0, 1, 1], [], []>} : vector<32x32xf32>, vector<32x64xf32>, vector<32x64xf32> -> vector<32x64xf32>
    %c0_20 = arith.constant 0 : index
    %c0_21 = arith.constant 0 : index
    %37 = vector.load %arg5[%c0_20, %c0_21] : memref<3x64xf32, #tpu.memory_space<vmem>>, vector<3x64xf32>
    %38 = vector.extract_strided_slice %37 {offsets = [0, 0], sizes = [1, 64], strides = [1, 1]} : vector<3x64xf32> to vector<1x64xf32>
    %39 = vector.broadcast %38 : vector<1x64xf32> to vector<32x64xf32>
    %40 = arith.mulf %39, %34 : vector<32x64xf32>
    %41 = vector.extract_strided_slice %37 {offsets = [1, 0], sizes = [1, 64], strides = [1, 1]} : vector<3x64xf32> to vector<1x64xf32>
    %42 = vector.broadcast %41 : vector<1x64xf32> to vector<32x64xf32>
    %43 = arith.mulf %42, %32 : vector<32x64xf32>
    %44 = arith.addf %40, %43 : vector<32x64xf32>
    %45 = vector.extract_strided_slice %37 {offsets = [2, 0], sizes = [1, 64], strides = [1, 1]} : vector<3x64xf32> to vector<1x64xf32>
    %46 = vector.broadcast %45 : vector<1x64xf32> to vector<32x64xf32>
    %47 = arith.mulf %46, %36 : vector<32x64xf32>
    %48 = arith.addf %44, %47 : vector<32x64xf32>
    %c0_22 = arith.constant 0 : index
    %c0_23 = arith.constant 0 : index
    %49 = vector.load %arg6[%c0_22, %c0_23] : memref<1x64xf32, #tpu.memory_space<vmem>>, vector<1x64xf32>
    %50 = vector.broadcast %49 : vector<1x64xf32> to vector<32x64xf32>
    %51 = arith.addf %48, %50 : vector<32x64xf32>
    %c0_24 = arith.constant 0 : index
    %c0_25 = arith.constant 0 : index
    %52 = vector.load %arg7[%c0_24, %c0_25] : memref<64x64xf32, #tpu.memory_space<vmem>>, vector<64x64xf32>
    %53 = arith.truncf %51 : vector<32x64xf32> to vector<32x64xbf16>
    %54 = arith.truncf %52 : vector<64x64xf32> to vector<64x64xbf16>
    %cst_26 = arith.constant dense<0.000000e+00> : vector<32x64xf32>
    %55 = tpu.matmul %53, %54, %cst_26 {dimension_numbers = #tpu.dot_dimension_numbers<[1], [0], [0], [1], [0, 0, 1, 1], [], []>} : vector<32x64xbf16>, vector<64x64xbf16>, vector<32x64xf32> -> vector<32x64xf32>
    %c0_27 = arith.constant 0 : index
    %c0_28 = arith.constant 0 : index
    %56 = vector.load %arg8[%c0_27, %c0_28] : memref<1x64xf32, #tpu.memory_space<vmem>>, vector<1x64xf32>
    %57 = vector.broadcast %56 : vector<1x64xf32> to vector<32x64xf32>
    %58 = arith.addf %55, %57 : vector<32x64xf32>
    %59 = arith.addf %58, %32 : vector<32x64xf32>
    %cst_29 = arith.constant 0.000000e+00 : f32
    %60 = vector.broadcast %cst_29 : f32 to vector<32x64xf32>
    %61 = arith.maximumf %59, %60 : vector<32x64xf32>
    %c0_30 = arith.constant 0 : index
    %c0_31 = arith.constant 0 : index
    %62 = vector.load %arg9[%c0_30, %c0_31] : memref<64x32xf32, #tpu.memory_space<vmem>>, vector<64x32xf32>
    %63 = arith.truncf %61 : vector<32x64xf32> to vector<32x64xbf16>
    %64 = arith.truncf %62 : vector<64x32xf32> to vector<64x32xbf16>
    %cst_32 = arith.constant dense<0.000000e+00> : vector<32x32xf32>
    %65 = tpu.matmul %63, %64, %cst_32 {dimension_numbers = #tpu.dot_dimension_numbers<[1], [0], [0], [1], [0, 0, 1, 1], [], []>} : vector<32x64xbf16>, vector<64x32xbf16>, vector<32x32xf32> -> vector<32x32xf32>
    %c0_33 = arith.constant 0 : index
    %c0_34 = arith.constant 0 : index
    %66 = vector.load %arg10[%c0_33, %c0_34] : memref<1x32xf32, #tpu.memory_space<vmem>>, vector<1x32xf32>
    %67 = vector.broadcast %66 : vector<1x32xf32> to vector<32x32xf32>
    %68 = arith.addf %65, %67 : vector<32x32xf32>
    %69 = tpu.iota {dimensions = array<i32: 1>} : vector<2x16x1xi32>
    %70 = arith.sitofp %69 : vector<2x16x1xi32> to vector<2x16x1xf32>
    %71 = vector.shape_cast %70 : vector<2x16x1xf32> to vector<32x1xf32>
    %cst_35 = arith.constant 6.250000e-02 : f32
    %72 = vector.broadcast %cst_35 : f32 to vector<32x1xf32>
    %73 = arith.mulf %71, %72 : vector<32x1xf32>
    %c0_36 = arith.constant 0 : index
    %c0_37 = arith.constant 0 : index
    %74 = vector.load %arg11[%c0_36, %c0_37] : memref<32x32xf32, #tpu.memory_space<vmem>>, vector<32x32xf32>
    %75 = arith.truncf %68 : vector<32x32xf32> to vector<32x32xbf16>
    %76 = arith.truncf %74 : vector<32x32xf32> to vector<32x32xbf16>
    %cst_38 = arith.constant dense<0.000000e+00> : vector<32x32xf32>
    %77 = tpu.matmul %75, %76, %cst_38 {dimension_numbers = #tpu.dot_dimension_numbers<[1], [0], [0], [1], [0, 0, 1, 1], [], []>} : vector<32x32xbf16>, vector<32x32xbf16>, vector<32x32xf32> -> vector<32x32xf32>
    %c0_39 = arith.constant 0 : index
    %c0_40 = arith.constant 0 : index
    %78 = vector.load %arg12[%c0_39, %c0_40] : memref<1x32xf32, #tpu.memory_space<vmem>>, vector<1x32xf32>
    %79 = vector.broadcast %73 : vector<32x1xf32> to vector<32x32xf32>
    %80 = vector.broadcast %78 : vector<1x32xf32> to vector<32x32xf32>
    %81 = arith.mulf %79, %80 : vector<32x32xf32>
    %82 = arith.addf %77, %81 : vector<32x32xf32>
    %c0_41 = arith.constant 0 : index
    %c0_42 = arith.constant 0 : index
    %83 = vector.load %arg13[%c0_41, %c0_42] : memref<1x32xf32, #tpu.memory_space<vmem>>, vector<1x32xf32>
    %84 = vector.broadcast %83 : vector<1x32xf32> to vector<32x32xf32>
    %85 = arith.addf %82, %84 : vector<32x32xf32>
    %c0_43 = arith.constant 0 : index
    %c0_44 = arith.constant 0 : index
    %86 = vector.load %arg14[%c0_43, %c0_44] : memref<32x96xf32, #tpu.memory_space<vmem>>, vector<32x96xf32>
    %87 = arith.truncf %85 : vector<32x32xf32> to vector<32x32xbf16>
    %88 = arith.truncf %86 : vector<32x96xf32> to vector<32x96xbf16>
    %cst_45 = arith.constant dense<0.000000e+00> : vector<32x96xf32>
    %89 = tpu.matmul %87, %88, %cst_45 {dimension_numbers = #tpu.dot_dimension_numbers<[1], [0], [0], [1], [0, 0, 1, 1], [], []>} : vector<32x32xbf16>, vector<32x96xbf16>, vector<32x96xf32> -> vector<32x96xf32>
    %c0_46 = arith.constant 0 : index
    %c0_47 = arith.constant 0 : index
    %90 = vector.load %arg15[%c0_46, %c0_47] : memref<1x96xf32, #tpu.memory_space<vmem>>, vector<1x96xf32>
    %91 = vector.broadcast %90 : vector<1x96xf32> to vector<32x96xf32>
    %92 = arith.addf %89, %91 : vector<32x96xf32>
    %93 = vector.extract_strided_slice %92 {offsets = [0, 0], sizes = [32, 32], strides = [1, 1]} : vector<32x96xf32> to vector<32x32xf32>
    %94 = vector.shape_cast %93 : vector<32x32xf32> to vector<2x16x32xf32>
    %95 = vector.extract_strided_slice %92 {offsets = [0, 32], sizes = [32, 32], strides = [1, 1]} : vector<32x96xf32> to vector<32x32xf32>
    %96 = vector.shape_cast %95 : vector<32x32xf32> to vector<2x16x32xf32>
    %97 = vector.extract_strided_slice %92 {offsets = [0, 64], sizes = [32, 32], strides = [1, 1]} : vector<32x96xf32> to vector<32x32xf32>
    %98 = vector.shape_cast %97 : vector<32x32xf32> to vector<2x16x32xf32>
    %99 = vector.extract_strided_slice %94 {offsets = [0, 0, 0], sizes = [2, 16, 16], strides = [1, 1, 1]} : vector<2x16x32xf32> to vector<2x16x16xf32>
    %100 = arith.truncf %99 : vector<2x16x16xf32> to vector<2x16x16xbf16>
    %101 = vector.extract_strided_slice %96 {offsets = [0, 0, 0], sizes = [2, 16, 16], strides = [1, 1, 1]} : vector<2x16x32xf32> to vector<2x16x16xf32>
    %102 = arith.truncf %101 : vector<2x16x16xf32> to vector<2x16x16xbf16>
    %103 = vector.extract_strided_slice %98 {offsets = [0, 0, 0], sizes = [2, 16, 16], strides = [1, 1, 1]} : vector<2x16x32xf32> to vector<2x16x16xf32>
    %104 = arith.truncf %103 : vector<2x16x16xf32> to vector<2x16x16xbf16>
    "tpu.trace_start"() <{level = 10 : i32, message = "bqd,bkd->bqk"}> : () -> ()
    %cst_48 = arith.constant dense<0.000000e+00> : vector<2x16x16xf32>
    %105 = tpu.matmul %100, %102, %cst_48 {dimension_numbers = #tpu.dot_dimension_numbers<[2], [2], [1], [1], [0, 0, 0, 1, 1, 1], [0], [0]>} : vector<2x16x16xbf16>, vector<2x16x16xbf16>, vector<2x16x16xf32> -> vector<2x16x16xf32>
    "tpu.trace_stop"() : () -> ()
    %cst_49 = arith.constant 2.500000e-01 : f32
    %106 = vector.broadcast %cst_49 : f32 to vector<2x16x16xf32>
    %107 = arith.mulf %105, %106 : vector<2x16x16xf32>
    %cst_50 = arith.constant dense<0xFF800000> : vector<2x16xf32>
    %108 = vector.multi_reduction <maximumf>, %107, %cst_50 [2] : vector<2x16x16xf32> to vector<2x16xf32>
    %109 = vector.shape_cast %108 : vector<2x16xf32> to vector<2x16x1xf32>
    %110 = vector.broadcast %109 : vector<2x16x1xf32> to vector<2x16x16xf32>
    %111 = arith.subf %107, %110 : vector<2x16x16xf32>
    %112 = math.exp %111 : vector<2x16x16xf32>
    %cst_51 = arith.constant dense<0.000000e+00> : vector<2x16xf32>
    %113 = vector.multi_reduction <add>, %112, %cst_51 [2] : vector<2x16x16xf32> to vector<2x16xf32>
    %114 = vector.shape_cast %113 : vector<2x16xf32> to vector<2x16x1xf32>
    %115 = tpu.reciprocal %114 {approx = true} : vector<2x16x1xf32> -> vector<2x16x1xf32>
    %116 = vector.broadcast %115 : vector<2x16x1xf32> to vector<2x16x16xf32>
    %117 = arith.mulf %112, %116 : vector<2x16x16xf32>
    %118 = arith.truncf %117 : vector<2x16x16xf32> to vector<2x16x16xbf16>
    "tpu.trace_start"() <{level = 10 : i32, message = "bqk,bkd->bqd"}> : () -> ()
    %cst_52 = arith.constant dense<0.000000e+00> : vector<2x16x16xf32>
    %119 = tpu.matmul %118, %104, %cst_52 {dimension_numbers = #tpu.dot_dimension_numbers<[2], [1], [1], [2], [0, 0, 0, 1, 1, 2], [0], [0]>} : vector<2x16x16xbf16>, vector<2x16x16xbf16>, vector<2x16x16xf32> -> vector<2x16x16xf32>
    "tpu.trace_stop"() : () -> ()
    %120 = vector.extract_strided_slice %94 {offsets = [0, 0, 16], sizes = [2, 16, 16], strides = [1, 1, 1]} : vector<2x16x32xf32> to vector<2x16x16xf32>
    %121 = arith.truncf %120 : vector<2x16x16xf32> to vector<2x16x16xbf16>
    %122 = vector.extract_strided_slice %96 {offsets = [0, 0, 16], sizes = [2, 16, 16], strides = [1, 1, 1]} : vector<2x16x32xf32> to vector<2x16x16xf32>
    %123 = arith.truncf %122 : vector<2x16x16xf32> to vector<2x16x16xbf16>
    %124 = vector.extract_strided_slice %98 {offsets = [0, 0, 16], sizes = [2, 16, 16], strides = [1, 1, 1]} : vector<2x16x32xf32> to vector<2x16x16xf32>
    %125 = arith.truncf %124 : vector<2x16x16xf32> to vector<2x16x16xbf16>
    "tpu.trace_start"() <{level = 10 : i32, message = "bqd,bkd->bqk"}> : () -> ()
    %cst_53 = arith.constant dense<0.000000e+00> : vector<2x16x16xf32>
    %126 = tpu.matmul %121, %123, %cst_53 {dimension_numbers = #tpu.dot_dimension_numbers<[2], [2], [1], [1], [0, 0, 0, 1, 1, 1], [0], [0]>} : vector<2x16x16xbf16>, vector<2x16x16xbf16>, vector<2x16x16xf32> -> vector<2x16x16xf32>
    "tpu.trace_stop"() : () -> ()
    %cst_54 = arith.constant 2.500000e-01 : f32
    %127 = vector.broadcast %cst_54 : f32 to vector<2x16x16xf32>
    %128 = arith.mulf %126, %127 : vector<2x16x16xf32>
    %cst_55 = arith.constant dense<0xFF800000> : vector<2x16xf32>
    %129 = vector.multi_reduction <maximumf>, %128, %cst_55 [2] : vector<2x16x16xf32> to vector<2x16xf32>
    %130 = vector.shape_cast %129 : vector<2x16xf32> to vector<2x16x1xf32>
    %131 = vector.broadcast %130 : vector<2x16x1xf32> to vector<2x16x16xf32>
    %132 = arith.subf %128, %131 : vector<2x16x16xf32>
    %133 = math.exp %132 : vector<2x16x16xf32>
    %cst_56 = arith.constant dense<0.000000e+00> : vector<2x16xf32>
    %134 = vector.multi_reduction <add>, %133, %cst_56 [2] : vector<2x16x16xf32> to vector<2x16xf32>
    %135 = vector.shape_cast %134 : vector<2x16xf32> to vector<2x16x1xf32>
    %136 = tpu.reciprocal %135 {approx = true} : vector<2x16x1xf32> -> vector<2x16x1xf32>
    %137 = vector.broadcast %136 : vector<2x16x1xf32> to vector<2x16x16xf32>
    %138 = arith.mulf %133, %137 : vector<2x16x16xf32>
    %139 = arith.truncf %138 : vector<2x16x16xf32> to vector<2x16x16xbf16>
    "tpu.trace_start"() <{level = 10 : i32, message = "bqk,bkd->bqd"}> : () -> ()
    %cst_57 = arith.constant dense<0.000000e+00> : vector<2x16x16xf32>
    %140 = tpu.matmul %139, %125, %cst_57 {dimension_numbers = #tpu.dot_dimension_numbers<[2], [1], [1], [2], [0, 0, 0, 1, 1, 2], [0], [0]>} : vector<2x16x16xbf16>, vector<2x16x16xbf16>, vector<2x16x16xf32> -> vector<2x16x16xf32>
    "tpu.trace_stop"() : () -> ()
    %141 = tpu.concatenate %119, %140 in 2 : vector<2x16x16xf32>, vector<2x16x16xf32> -> vector<2x16x32xf32>
    %142 = vector.shape_cast %141 : vector<2x16x32xf32> to vector<32x32xf32>
    %c0_58 = arith.constant 0 : index
    %c0_59 = arith.constant 0 : index
    %143 = vector.load %arg16[%c0_58, %c0_59] : memref<32x32xf32, #tpu.memory_space<vmem>>, vector<32x32xf32>
    %144 = arith.truncf %142 : vector<32x32xf32> to vector<32x32xbf16>
    %145 = arith.truncf %143 : vector<32x32xf32> to vector<32x32xbf16>
    %cst_60 = arith.constant dense<0.000000e+00> : vector<32x32xf32>
    %146 = tpu.matmul %144, %145, %cst_60 {dimension_numbers = #tpu.dot_dimension_numbers<[1], [0], [0], [1], [0, 0, 1, 1], [], []>} : vector<32x32xbf16>, vector<32x32xbf16>, vector<32x32xf32> -> vector<32x32xf32>
    %147 = arith.addf %85, %146 : vector<32x32xf32>
    %c0_61 = arith.constant 0 : index
    %c0_62 = arith.constant 0 : index
    %148 = vector.load %arg17[%c0_61, %c0_62] : memref<1x32xf32, #tpu.memory_space<vmem>>, vector<1x32xf32>
    %149 = vector.broadcast %148 : vector<1x32xf32> to vector<32x32xf32>
    %150 = arith.addf %147, %149 : vector<32x32xf32>
    %c0_63 = arith.constant 0 : index
    %c0_64 = arith.constant 0 : index
    %151 = vector.load %arg18[%c0_63, %c0_64] : memref<32x64xf32, #tpu.memory_space<vmem>>, vector<32x64xf32>
    %152 = arith.truncf %150 : vector<32x32xf32> to vector<32x32xbf16>
    %153 = arith.truncf %151 : vector<32x64xf32> to vector<32x64xbf16>
    %cst_65 = arith.constant dense<0.000000e+00> : vector<32x64xf32>
    %154 = tpu.matmul %152, %153, %cst_65 {dimension_numbers = #tpu.dot_dimension_numbers<[1], [0], [0], [1], [0, 0, 1, 1], [], []>} : vector<32x32xbf16>, vector<32x64xbf16>, vector<32x64xf32> -> vector<32x64xf32>
    %c0_66 = arith.constant 0 : index
    %c0_67 = arith.constant 0 : index
    %155 = vector.load %arg19[%c0_66, %c0_67] : memref<1x64xf32, #tpu.memory_space<vmem>>, vector<1x64xf32>
    %156 = vector.broadcast %155 : vector<1x64xf32> to vector<32x64xf32>
    %157 = arith.addf %154, %156 : vector<32x64xf32>
    %cst_68 = arith.constant 0.000000e+00 : f32
    %158 = vector.broadcast %cst_68 : f32 to vector<32x64xf32>
    %159 = arith.maximumf %157, %158 : vector<32x64xf32>
    %c0_69 = arith.constant 0 : index
    %c0_70 = arith.constant 0 : index
    %160 = vector.load %arg20[%c0_69, %c0_70] : memref<64x32xf32, #tpu.memory_space<vmem>>, vector<64x32xf32>
    %161 = arith.truncf %159 : vector<32x64xf32> to vector<32x64xbf16>
    %162 = arith.truncf %160 : vector<64x32xf32> to vector<64x32xbf16>
    %cst_71 = arith.constant dense<0.000000e+00> : vector<32x32xf32>
    %163 = tpu.matmul %161, %162, %cst_71 {dimension_numbers = #tpu.dot_dimension_numbers<[1], [0], [0], [1], [0, 0, 1, 1], [], []>} : vector<32x64xbf16>, vector<64x32xbf16>, vector<32x32xf32> -> vector<32x32xf32>
    %164 = arith.addf %150, %163 : vector<32x32xf32>
    %c0_72 = arith.constant 0 : index
    %c0_73 = arith.constant 0 : index
    %165 = vector.load %arg21[%c0_72, %c0_73] : memref<1x32xf32, #tpu.memory_space<vmem>>, vector<1x32xf32>
    %166 = vector.broadcast %165 : vector<1x32xf32> to vector<32x32xf32>
    %167 = arith.addf %164, %166 : vector<32x32xf32>
    %cst_74 = arith.constant dense<0.000000e+00> : vector<32xf32>
    %168 = vector.multi_reduction <add>, %167, %cst_74 [1] : vector<32x32xf32> to vector<32xf32>
    %169 = vector.shape_cast %168 : vector<32xf32> to vector<32x1xf32>
    %cst_75 = arith.constant 3.200000e+01 : f32
    %170 = vector.broadcast %cst_75 : f32 to vector<32x1xf32>
    %171 = arith.divf %169, %170 : vector<32x1xf32>
    %172 = vector.broadcast %171 : vector<32x1xf32> to vector<32x32xf32>
    %173 = arith.subf %167, %172 : vector<32x32xf32>
    %174 = arith.mulf %173, %173 : vector<32x32xf32>
    %cst_76 = arith.constant dense<0.000000e+00> : vector<32xf32>
    %175 = vector.multi_reduction <add>, %174, %cst_76 [1] : vector<32x32xf32> to vector<32xf32>
    %176 = vector.shape_cast %175 : vector<32xf32> to vector<32x1xf32>
    %cst_77 = arith.constant 3.200000e+01 : f32
    %177 = vector.broadcast %cst_77 : f32 to vector<32x1xf32>
    %178 = arith.divf %176, %177 : vector<32x1xf32>
    %179 = vector.broadcast %171 : vector<32x1xf32> to vector<32x32xf32>
    %180 = arith.subf %167, %179 : vector<32x32xf32>
    %cst_78 = arith.constant 9.99999974E-6 : f32
    %181 = vector.broadcast %cst_78 : f32 to vector<32x1xf32>
    %182 = arith.addf %178, %181 : vector<32x1xf32>
    %183 = math.rsqrt %182 : vector<32x1xf32>
    %184 = vector.broadcast %183 : vector<32x1xf32> to vector<32x32xf32>
    %185 = arith.mulf %180, %184 : vector<32x32xf32>
    %c0_79 = arith.constant 0 : index
    %c0_80 = arith.constant 0 : index
    %186 = vector.load %arg22[%c0_79, %c0_80] : memref<1x32xf32, #tpu.memory_space<vmem>>, vector<1x32xf32>
    %187 = vector.broadcast %186 : vector<1x32xf32> to vector<32x32xf32>
    %188 = arith.mulf %185, %187 : vector<32x32xf32>
    %c0_81 = arith.constant 0 : index
    %c0_82 = arith.constant 0 : index
    %189 = vector.load %arg23[%c0_81, %c0_82] : memref<1x32xf32, #tpu.memory_space<vmem>>, vector<1x32xf32>
    %190 = vector.broadcast %189 : vector<1x32xf32> to vector<32x32xf32>
    %191 = arith.addf %188, %190 : vector<32x32xf32>
    %c0_83 = arith.constant 0 : index
    %c0_84 = arith.constant 0 : index
    %192 = vector.load %arg24[%c0_83, %c0_84] : memref<32x32xf32, #tpu.memory_space<vmem>>, vector<32x32xf32>
    %193 = arith.truncf %191 : vector<32x32xf32> to vector<32x32xbf16>
    %194 = arith.truncf %192 : vector<32x32xf32> to vector<32x32xbf16>
    %cst_85 = arith.constant dense<0.000000e+00> : vector<32x32xf32>
    %195 = tpu.matmul %193, %194, %cst_85 {dimension_numbers = #tpu.dot_dimension_numbers<[1], [0], [0], [1], [0, 0, 1, 1], [], []>} : vector<32x32xbf16>, vector<32x32xbf16>, vector<32x32xf32> -> vector<32x32xf32>
    %c0_86 = arith.constant 0 : index
    %c0_87 = arith.constant 0 : index
    %196 = vector.load %arg25[%c0_86, %c0_87] : memref<1x32xf32, #tpu.memory_space<vmem>>, vector<1x32xf32>
    %197 = vector.broadcast %196 : vector<1x32xf32> to vector<32x32xf32>
    %198 = arith.addf %195, %197 : vector<32x32xf32>
    %199 = arith.negf %198 : vector<32x32xf32>
    %200 = math.exp %199 : vector<32x32xf32>
    %cst_88 = arith.constant 1.000000e+00 : f32
    %201 = vector.broadcast %cst_88 : f32 to vector<32x32xf32>
    %202 = arith.addf %201, %200 : vector<32x32xf32>
    %203 = arith.divf %201, %202 : vector<32x32xf32>
    %204 = arith.mulf %191, %203 : vector<32x32xf32>
    %205 = arith.addf %191, %204 : vector<32x32xf32>
    %c0_89 = arith.constant 0 : index
    %c0_90 = arith.constant 0 : index
    %206 = vector.load %arg26[%c0_89, %c0_90] : memref<32x32xf32, #tpu.memory_space<vmem>>, vector<32x32xf32>
    %207 = arith.truncf %205 : vector<32x32xf32> to vector<32x32xbf16>
    %208 = arith.truncf %206 : vector<32x32xf32> to vector<32x32xbf16>
    %cst_91 = arith.constant dense<0.000000e+00> : vector<32x32xf32>
    %209 = tpu.matmul %207, %208, %cst_91 {dimension_numbers = #tpu.dot_dimension_numbers<[1], [0], [0], [1], [0, 0, 1, 1], [], []>} : vector<32x32xbf16>, vector<32x32xbf16>, vector<32x32xf32> -> vector<32x32xf32>
    %c0_92 = arith.constant 0 : index
    %c0_93 = arith.constant 0 : index
    %210 = vector.load %arg27[%c0_92, %c0_93] : memref<1x32xf32, #tpu.memory_space<vmem>>, vector<1x32xf32>
    %211 = vector.broadcast %210 : vector<1x32xf32> to vector<32x32xf32>
    %212 = arith.addf %209, %211 : vector<32x32xf32>
    %213 = math.tanh %212 : vector<32x32xf32>
    %214 = vector.shape_cast %213 : vector<32x32xf32> to vector<2x16x32xf32>
    %215 = vector.shape_cast %205 : vector<32x32xf32> to vector<2x16x32xf32>
    %c0_94 = arith.constant 0 : index
    %c0_95 = arith.constant 0 : index
    %216 = vector.load %arg28[%c0_94, %c0_95] : memref<1x32xf32, #tpu.memory_space<vmem>>, vector<1x32xf32>
    %217 = vector.shape_cast %216 : vector<1x32xf32> to vector<1x1x32xf32>
    %218 = vector.broadcast %217 : vector<1x1x32xf32> to vector<2x16x32xf32>
    %219 = arith.mulf %214, %218 : vector<2x16x32xf32>
    %cst_96 = arith.constant dense<0.000000e+00> : vector<2x16xf32>
    %220 = vector.multi_reduction <add>, %219, %cst_96 [2] : vector<2x16x32xf32> to vector<2x16xf32>
    %221 = vector.shape_cast %220 : vector<2x16xf32> to vector<2x16x1xf32>
    %c0_97 = arith.constant 0 : index
    %c0_98 = arith.constant 0 : index
    %222 = vector.load %arg29[%c0_97, %c0_98] : memref<1x1xf32, #tpu.memory_space<vmem>>, vector<1x1xf32>
    %223 = vector.shape_cast %222 : vector<1x1xf32> to vector<1x1x1xf32>
    %224 = vector.broadcast %223 : vector<1x1x1xf32> to vector<2x16x1xf32>
    %225 = arith.addf %221, %224 : vector<2x16x1xf32>
    %cst_99 = arith.constant dense<0xFF800000> : vector<2x1xf32>
    %226 = vector.multi_reduction <maximumf>, %225, %cst_99 [1] : vector<2x16x1xf32> to vector<2x1xf32>
    %227 = vector.shape_cast %226 : vector<2x1xf32> to vector<2x1x1xf32>
    %228 = vector.broadcast %227 : vector<2x1x1xf32> to vector<2x16x1xf32>
    %229 = arith.subf %225, %228 : vector<2x16x1xf32>
    %230 = math.exp %229 : vector<2x16x1xf32>
    %cst_100 = arith.constant dense<0.000000e+00> : vector<2x1xf32>
    %231 = vector.multi_reduction <add>, %230, %cst_100 [1] : vector<2x16x1xf32> to vector<2x1xf32>
    %232 = vector.shape_cast %231 : vector<2x1xf32> to vector<2x1x1xf32>
    %233 = tpu.reciprocal %232 {approx = true} : vector<2x1x1xf32> -> vector<2x1x1xf32>
    %234 = vector.broadcast %233 : vector<2x1x1xf32> to vector<2x16x1xf32>
    %235 = arith.mulf %230, %234 : vector<2x16x1xf32>
    %236 = vector.broadcast %235 : vector<2x16x1xf32> to vector<2x16x32xf32>
    %237 = arith.mulf %236, %215 : vector<2x16x32xf32>
    %cst_101 = arith.constant dense<0.000000e+00> : vector<2x32xf32>
    %238 = vector.multi_reduction <add>, %237, %cst_101 [1] : vector<2x16x32xf32> to vector<2x32xf32>
    %c0_102 = arith.constant 0 : index
    %c0_103 = arith.constant 0 : index
    %239 = vector.load %arg30[%c0_102, %c0_103] : memref<32x10xf32, #tpu.memory_space<vmem>>, vector<32x10xf32>
    %240 = arith.truncf %238 : vector<2x32xf32> to vector<2x32xbf16>
    %241 = arith.truncf %239 : vector<32x10xf32> to vector<32x10xbf16>
    %cst_104 = arith.constant dense<0.000000e+00> : vector<2x10xf32>
    %242 = tpu.matmul %240, %241, %cst_104 {dimension_numbers = #tpu.dot_dimension_numbers<[1], [0], [0], [1], [0, 0, 1, 1], [], []>} : vector<2x32xbf16>, vector<32x10xbf16>, vector<2x10xf32> -> vector<2x10xf32>
    %c0_105 = arith.constant 0 : index
    %c0_106 = arith.constant 0 : index
    %243 = vector.load %arg31[%c0_105, %c0_106] : memref<1x10xf32, #tpu.memory_space<vmem>>, vector<1x10xf32>
    %244 = vector.broadcast %243 : vector<1x10xf32> to vector<2x10xf32>
    %245 = arith.addf %242, %244 : vector<2x10xf32>
    %c0_107 = arith.constant 0 : index
    %c0_108 = arith.constant 0 : index
    %246 = vector.load %arg32[%c0_107, %c0_108] : memref<2x10xf32, #tpu.memory_space<vmem>>, vector<2x10xf32>
    tpu.vector_store %arg32[%c0_107, %c0_108], %245 {strides = array<i32>} : memref<2x10xf32, #tpu.memory_space<vmem>>, vector<2x10xf32>,
    return
  }
}

</mosaic_0001>

<llo_original>
// kernel: forward.1
$region0: #{forward.1}
  #allocation0 [shape = 'u32[]', space=smem, size = 0x4, offset = 0x4, fixed_abs, tag = 'smem constant byte address 0x4 - core index']
  #allocation1 [shape = 'u32[144,128]{1,0:T(1,128)}', space=vmem, size = 0x12000, scoped, tag = 'internal scratch']
  #allocation2 [shape = 'f32[1,1]{1,0:T(1,128)S(1)}', space=vmem, size = 0x200, scoped, tag = 'scoped memory for forward.1']
  %s0 = inlined_call_operand.smem [shape: u32[33], index: -1, kind: input, shape index: {}]
  %s1 = sld [smem:[%s0]]
  %s2 = scalar_lea.smem %s0, 1
  %s3 = sld [smem:[%s2]]
  %s4 = scalar_lea.smem %s0, 2
  %s5 = sld [smem:[%s4]]
  %s6 = scalar_lea.smem %s0, 3
  %s7 = sld [smem:[%s6]]
  %s8 = scalar_lea.smem %s0, 4
  %s9 = sld [smem:[%s8]]
  %s10 = scalar_lea.smem %s0, 5
  %s11 = sld [smem:[%s10]]
  %s12 = scalar_lea.smem %s0, 6
  %s13 = sld [smem:[%s12]]
  %s14 = scalar_lea.smem %s0, 7
  %s15 = sld [smem:[%s14]]
  %s16 = scalar_lea.smem %s0, 8
  %s17 = sld [smem:[%s16]]
  %s18 = scalar_lea.smem %s0, 9
  %s19 = sld [smem:[%s18]]
  %s20 = scalar_lea.smem %s0, 10
  %s21 = sld [smem:[%s20]]
  %s22 = scalar_lea.smem %s0, 11
  %s23 = sld [smem:[%s22]]
  %s24 = scalar_lea.smem %s0, 12
  %s25 = sld [smem:[%s24]]
  %s26 = scalar_lea.smem %s0, 13
  %s27 = sld [smem:[%s26]]
  %s28 = scalar_lea.smem %s0, 14
  %s29 = sld [smem:[%s28]]
  %s30 = scalar_lea.smem %s0, 15
  %s31 = sld [smem:[%s30]]
  %s32 = scalar_lea.smem %s0, 16
  %s33 = sld [smem:[%s32]]
  %s34 = scalar_lea.smem %s0, 17
  %s35 = sld [smem:[%s34]]
  %s36 = scalar_lea.smem %s0, 18
  %s37 = sld [smem:[%s36]]
  %s38 = scalar_lea.smem %s0, 19
  %s39 = sld [smem:[%s38]]
  %s40 = scalar_lea.smem %s0, 20
  %s41 = sld [smem:[%s40]]
  %s42 = scalar_lea.smem %s0, 21
  %s43 = sld [smem:[%s42]]
  %s44 = scalar_lea.smem %s0, 22
  %s45 = sld [smem:[%s44]]
  %s46 = scalar_lea.smem %s0, 23
  %s47 = sld [smem:[%s46]]
  %s48 = scalar_lea.smem %s0, 24
  %s49 = sld [smem:[%s48]]
  %s50 = scalar_lea.smem %s0, 25
  %s51 = sld [smem:[%s50]]
  %s52 = scalar_lea.smem %s0, 26
  %s53 = sld [smem:[%s52]]
  %s54 = scalar_lea.smem %s0, 27
  %s55 = sld [smem:[%s54]]
  %s56 = scalar_lea.smem %s0, 28
  %s57 = sld [smem:[%s56]]
  %s58 = scalar_lea.smem %s0, 29
  %s59 = sld [smem:[%s58]]
  %s60 = scalar_lea.smem %s0, 30
  %s61 = sld [smem:[%s60]]
  %s62 = scalar_lea.smem %s0, 31
  %s63 = sld [smem:[%s62]]
  %s64 = scalar_lea.smem %s0, 32
  %s65 = sld [smem:[%s64]]
  %s66 = sld [smem:[#allocation0]]
  $region198: #{forward.1} parent=0
    _
  %s68 = ssub.s32 1, %s66
  %s69 = scalar_select 0, %s68, %s66
  %v70 = vstv %s59
  %71 = vst [vmem:[#allocation2] sm:$0x1] %v70
  $region1: #{forward.1} parent=0
    #allocation3 [shape = 'u8[512]{0}', space=vmem, size = 0x400, scoped, tag = 'input window, operand 6, single buffered']
    #allocation4 [shape = 's32[1]{0}', space=sflag, size = 0x4, scoped, tag = 'scoped memory for forward.1']
    #allocation5 [shape = 's32[1]{0}', space=sflag, size = 0x4, scoped, tag = 'scoped memory for forward.1']
    #allocation6 [shape = 'u8[512]{0}', space=vmem, size = 0x400, scoped, tag = 'input window, operand 10, single buffered']
    #allocation7 [shape = 's32[1]{0}', space=sflag, size = 0x4, scoped, tag = 'scoped memory for forward.1']
    #allocation8 [shape = 'u8[512]{0}', space=vmem, size = 0x400, scoped, tag = 'input window, operand 12, single buffered']
    #allocation9 [shape = 'u8[512]{0}', space=vmem, size = 0x400, scoped, tag = 'input window, operand 13, single buffered']
    #allocation10 [shape = 's32[1]{0}', space=sflag, size = 0x4, scoped, tag = 'scoped memory for forward.1']
    #allocation11 [shape = 'u8[512]{0}', space=vmem, size = 0x400, scoped, tag = 'input window, operand 15, single buffered']
    #allocation12 [shape = 'u8[512]{0}', space=vmem, size = 0x400, scoped, tag = 'input window, operand 17, single buffered']
    #allocation13 [shape = 's32[1]{0}', space=sflag, size = 0x4, scoped, tag = 'scoped memory for forward.1']
    #allocation14 [shape = 'u8[512]{0}', space=vmem, size = 0x400, scoped, tag = 'input window, operand 19, single buffered']
    #allocation15 [shape = 'u8[512]{0}', space=vmem, size = 0x400, scoped, tag = 'input window, operand 21, single buffered']
    #allocation16 [shape = 's32[1]{0}', space=sflag, size = 0x4, scoped, tag = 'scoped memory for forward.1']
    #allocation17 [shape = 'u8[512]{0}', space=vmem, size = 0x400, scoped, tag = 'input window, operand 22, single buffered']
    #allocation18 [shape = 'u8[512]{0}', space=vmem, size = 0x400, scoped, tag = 'input window, operand 23, single buffered']
    #allocation19 [shape = 's32[1]{0}', space=sflag, size = 0x4, scoped, tag = 'scoped memory for forward.1']
    #allocation20 [shape = 'u8[512]{0}', space=vmem, size = 0x400, scoped, tag = 'input window, operand 25, single buffered']
    #allocation21 [shape = 'u8[16384]{0}', space=vmem, size = 0x4000, scoped, tag = 'input window, operand 26, single buffered']
    #allocation22 [shape = 's32[1]{0}', space=sflag, size = 0x4, scoped, tag = 'scoped memory for forward.1']
    #allocation23 [shape = 'u8[512]{0}', space=vmem, size = 0x400, scoped, tag = 'input window, operand 27, single buffered']
    #allocation24 [shape = 'u8[512]{0}', space=vmem, size = 0x400, scoped, tag = 'input window, operand 28, single buffered']
    #allocation25 [shape = 's32[1]{0}', space=sflag, size = 0x4, scoped, tag = 'scoped memory for forward.1']
    #allocation26 [shape = 'u8[512]{0}', space=vmem, size = 0x400, scoped, tag = 'input window, operand 31, single buffered']
    #allocation27 [shape = 'u8[1024]{0}', space=vmem, size = 0x400, scoped, tag = 'output window, operand 0, single buffered']
    %72 = vsyncpa [#allocation4], 0
    %73 = vsyncpa [#allocation7], 0
    %74 = vsyncpa [#allocation10], 0
    %75 = vsyncpa [#allocation13], 0
    %76 = vsyncpa [#allocation16], 0
    %77 = vsyncpa [#allocation19], 0
    %78 = vsyncpa [#allocation22], 0
    %79 = vsyncpa [#allocation25], 0
    %80 = vsyncpa [#allocation5], 0
    // Predicated region
    $region2: #{forward.1} parent=1 // pred_check
      _
    $region3: #{forward.1} parent=1 // pred_check_branch
      %82 = sbr.rel (0) target = $region5
    $region4: #{forward.1} parent=1 // pred_region
      _
    $region5: #{forward.1} parent=1 // pred_fallthru
      _
    // Predicated region
    $region6: #{forward.1} parent=1 // pred_check
      _
    $region7: #{forward.1} parent=1 // pred_check_branch
      %84 = sbr.rel (0) target = $region9
    $region8: #{forward.1} parent=1 // pred_region
      _
    $region9: #{forward.1} parent=1 // pred_fallthru
      _
    // Predicated region
    $region10: #{forward.1} parent=1 // pred_check
      _
    $region11: #{forward.1} parent=1 // pred_check_branch
      %86 = sbr.rel (0) target = $region13
    $region12: #{forward.1} parent=1 // pred_region
      _
    $region13: #{forward.1} parent=1 // pred_fallthru
      _
    // Predicated region
    $region14: #{forward.1} parent=1 // pred_check
      _
    $region15: #{forward.1} parent=1 // pred_check_branch
      %88 = sbr.rel (0) target = $region17
    $region16: #{forward.1} parent=1 // pred_region
      _
    $region17: #{forward.1} parent=1 // pred_fallthru
      _
    // Predicated region
    $region18: #{forward.1} parent=1 // pred_check
      _
    $region19: #{forward.1} parent=1 // pred_check_branch
      %90 = sbr.rel (0) target = $region21
    $region20: #{forward.1} parent=1 // pred_region
      _
    $region21: #{forward.1} parent=1 // pred_fallthru
      _
    // Predicated region
    $region22: #{forward.1} parent=1 // pred_check
      _
    $region23: #{forward.1} parent=1 // pred_check_branch
      %92 = sbr.rel (0) target = $region25
    $region24: #{forward.1} parent=1 // pred_region
      _
    $region25: #{forward.1} parent=1 // pred_fallthru
      _
    // Predicated region
    $region26: #{forward.1} parent=1 // pred_check
      _
    $region27: #{forward.1} parent=1 // pred_check_branch
      %94 = sbr.rel (0) target = $region29
    $region28: #{forward.1} parent=1 // pred_region
      %s96 = ssub.s32 16, 16
      %97 = vsyncadd [#allocation4], %s96
      %s99 = sshll.u32 [#allocation3], 4
      %s100 = int_to_ptr.vmem [resolvable:$true] %s99
      %102 = dma.hbm_to_vmem [thread:$0]  %s13, 16, %s100, [#allocation4]
    $region29: #{forward.1} parent=1 // pred_fallthru
      _
    // Predicated region
    $region30: #{forward.1} parent=1 // pred_check
      _
    $region31: #{forward.1} parent=1 // pred_check_branch
      %104 = sbr.rel (0) target = $region33
    $region32: #{forward.1} parent=1 // pred_region
      _
    $region33: #{forward.1} parent=1 // pred_fallthru
      _
    // Predicated region
    $region34: #{forward.1} parent=1 // pred_check
      _
    $region35: #{forward.1} parent=1 // pred_check_branch
      %106 = sbr.rel (0) target = $region37
    $region36: #{forward.1} parent=1 // pred_region
      _
    $region37: #{forward.1} parent=1 // pred_fallthru
      _
    // Predicated region
    $region38: #{forward.1} parent=1 // pred_check
      _
    $region39: #{forward.1} parent=1 // pred_check_branch
      %108 = sbr.rel (0) target = $region41
    $region40: #{forward.1} parent=1 // pred_region
      _
    $region41: #{forward.1} parent=1 // pred_fallthru
      _
    // Predicated region
    $region42: #{forward.1} parent=1 // pred_check
      _
    $region43: #{forward.1} parent=1 // pred_check_branch
      %110 = sbr.rel (0) target = $region45
    $region44: #{forward.1} parent=1 // pred_region
      %s112 = ssub.s32 16, 16
      %113 = vsyncadd [#allocation7], %s112
      %s115 = sshll.u32 [#allocation6], 4
      %s116 = int_to_ptr.vmem [resolvable:$true] %s115
      %118 = dma.hbm_to_vmem [thread:$0]  %s21, 16, %s116, [#allocation7]
    $region45: #{forward.1} parent=1 // pred_fallthru
      _
    // Predicated region
    $region46: #{forward.1} parent=1 // pred_check
      _
    $region47: #{forward.1} parent=1 // pred_check_branch
      %120 = sbr.rel (0) target = $region49
    $region48: #{forward.1} parent=1 // pred_region
      _
    $region49: #{forward.1} parent=1 // pred_fallthru
      _
    // Predicated region
    $region50: #{forward.1} parent=1 // pred_check
      _
    $region51: #{forward.1} parent=1 // pred_check_branch
      %122 = sbr.rel (0) target = $region53
    $region52: #{forward.1} parent=1 // pred_region
      %s124 = ssub.s32 16, 16
      %125 = vsyncadd [#allocation7], %s124
      %s127 = sshll.u32 [#allocation8], 4
      %s128 = int_to_ptr.vmem [resolvable:$true] %s127
      %130 = dma.hbm_to_vmem [thread:$0]  %s25, 16, %s128, [#allocation7]
    $region53: #{forward.1} parent=1 // pred_fallthru
      _
    // Predicated region
    $region54: #{forward.1} parent=1 // pred_check
      _
    $region55: #{forward.1} parent=1 // pred_check_branch
      %132 = sbr.rel (0) target = $region57
    $region56: #{forward.1} parent=1 // pred_region
      %s134 = ssub.s32 16, 16
      %135 = vsyncadd [#allocation10], %s134
      %s137 = sshll.u32 [#allocation9], 4
      %s138 = int_to_ptr.vmem [resolvable:$true] %s137
      %140 = dma.hbm_to_vmem [thread:$0]  %s27, 16, %s138, [#allocation10]
    $region57: #{forward.1} parent=1 // pred_fallthru
      _
    // Predicated region
    $region58: #{forward.1} parent=1 // pred_check
      _
    $region59: #{forward.1} parent=1 // pred_check_branch
      %142 = sbr.rel (0) target = $region61
    $region60: #{forward.1} parent=1 // pred_region
      _
    $region61: #{forward.1} parent=1 // pred_fallthru
      _
    // Predicated region
    $region62: #{forward.1} parent=1 // pred_check
      _
    $region63: #{forward.1} parent=1 // pred_check_branch
      %144 = sbr.rel (0) target = $region65
    $region64: #{forward.1} parent=1 // pred_region
      %s146 = ssub.s32 16, 16
      %147 = vsyncadd [#allocation10], %s146
      %s149 = sshll.u32 [#allocation11], 4
      %s150 = int_to_ptr.vmem [resolvable:$true] %s149
      %152 = dma.hbm_to_vmem [thread:$0]  %s31, 16, %s150, [#allocation10]
    $region65: #{forward.1} parent=1 // pred_fallthru
      _
    // Predicated region
    $region66: #{forward.1} parent=1 // pred_check
      _
    $region67: #{forward.1} parent=1 // pred_check_branch
      %154 = sbr.rel (0) target = $region69
    $region68: #{forward.1} parent=1 // pred_region
      _
    $region69: #{forward.1} parent=1 // pred_fallthru
      _
    // Predicated region
    $region70: #{forward.1} parent=1 // pred_check
      _
    $region71: #{forward.1} parent=1 // pred_check_branch
      %156 = sbr.rel (0) target = $region73
    $region72: #{forward.1} parent=1 // pred_region
      %s158 = ssub.s32 16, 16
      %159 = vsyncadd [#allocation13], %s158
      %s161 = sshll.u32 [#allocation12], 4
      %s162 = int_to_ptr.vmem [resolvable:$true] %s161
      %164 = dma.hbm_to_vmem [thread:$0]  %s35, 16, %s162, [#allocation13]
    $region73: #{forward.1} parent=1 // pred_fallthru
      _
    // Predicated region
    $region74: #{forward.1} parent=1 // pred_check
      _
    $region75: #{forward.1} parent=1 // pred_check_branch
      %166 = sbr.rel (0) target = $region77
    $region76: #{forward.1} parent=1 // pred_region
      _
    $region77: #{forward.1} parent=1 // pred_fallthru
      _
    // Predicated region
    $region78: #{forward.1} parent=1 // pred_check
      _
    $region79: #{forward.1} parent=1 // pred_check_branch
      %168 = sbr.rel (0) target = $region81
    $region80: #{forward.1} parent=1 // pred_region
      %s170 = ssub.s32 16, 16
      %171 = vsyncadd [#allocation13], %s170
      %s173 = sshll.u32 [#allocation14], 4
      %s174 = int_to_ptr.vmem [resolvable:$true] %s173
      %176 = dma.hbm_to_vmem [thread:$0]  %s39, 16, %s174, [#allocation13]
    $region81: #{forward.1} parent=1 // pred_fallthru
      _
    // Predicated region
    $region82: #{forward.1} parent=1 // pred_check
      _
    $region83: #{forward.1} parent=1 // pred_check_branch
      %178 = sbr.rel (0) target = $region85
    $region84: #{forward.1} parent=1 // pred_region
      _
    $region85: #{forward.1} parent=1 // pred_fallthru
      _
    // Predicated region
    $region86: #{forward.1} parent=1 // pred_check
      _
    $region87: #{forward.1} parent=1 // pred_check_branch
      %180 = sbr.rel (0) target = $region89
    $region88: #{forward.1} parent=1 // pred_region
      %s182 = ssub.s32 16, 16
      %183 = vsyncadd [#allocation16], %s182
      %s185 = sshll.u32 [#allocation15], 4
      %s186 = int_to_ptr.vmem [resolvable:$true] %s185
      %188 = dma.hbm_to_vmem [thread:$0]  %s43, 16, %s186, [#allocation16]
    $region89: #{forward.1} parent=1 // pred_fallthru
      _
    // Predicated region
    $region90: #{forward.1} parent=1 // pred_check
      _
    $region91: #{forward.1} parent=1 // pred_check_branch
      %190 = sbr.rel (0) target = $region93
    $region92: #{forward.1} parent=1 // pred_region
      %s192 = ssub.s32 16, 16
      %193 = vsyncadd [#allocation16], %s192
      %s195 = sshll.u32 [#allocation17], 4
      %s196 = int_to_ptr.vmem [resolvable:$true] %s195
      %198 = dma.hbm_to_vmem [thread:$0]  %s45, 16, %s196, [#allocation16]
    $region93: #{forward.1} parent=1 // pred_fallthru
      _
    // Predicated region
    $region94: #{forward.1} parent=1 // pred_check
      _
    $region95: #{forward.1} parent=1 // pred_check_branch
      %200 = sbr.rel (0) target = $region97
    $region96: #{forward.1} parent=1 // pred_region
      %s202 = ssub.s32 16, 16
      %203 = vsyncadd [#allocation19], %s202
      %s205 = sshll.u32 [#allocation18], 4
      %s206 = int_to_ptr.vmem [resolvable:$true] %s205
      %208 = dma.hbm_to_vmem [thread:$0]  %s47, 16, %s206, [#allocation19]
    $region97: #{forward.1} parent=1 // pred_fallthru
      _
    // Predicated region
    $region98: #{forward.1} parent=1 // pred_check
      _
    $region99: #{forward.1} parent=1 // pred_check_branch
      %210 = sbr.rel (0) target = $region101
    $region100: #{forward.1} parent=1 // pred_region
      _
    $region101: #{forward.1} parent=1 // pred_fallthru
      _
    // Predicated region
    $region102: #{forward.1} parent=1 // pred_check
      _
    $region103: #{forward.1} parent=1 // pred_check_branch
      %212 = sbr.rel (0) target = $region105
    $region104: #{forward.1} parent=1 // pred_region
      %s214 = ssub.s32 16, 16
      %215 = vsyncadd [#allocation19], %s214
      %s217 = sshll.u32 [#allocation20], 4
      %s218 = int_to_ptr.vmem [resolvable:$true] %s217
      %220 = dma.hbm_to_vmem [thread:$0]  %s51, 16, %s218, [#allocation19]
    $region105: #{forward.1} parent=1 // pred_fallthru
      _
    // Predicated region
    $region106: #{forward.1} parent=1 // pred_check
      _
    $region107: #{forward.1} parent=1 // pred_check_branch
      %222 = sbr.rel (0) target = $region109
    $region108: #{forward.1} parent=1 // pred_region
      %s224 = ssub.s32 512, 512
      %225 = vsyncadd [#allocation22], %s224
      %s226 = sshll.u32 [#allocation21], 4
      %s227 = int_to_ptr.vmem [resolvable:$true] %s226
      %232 = dma.hbm_to_vmem [thread:$0]  %s53, 512, %s227, [#allocation22], 128, 128, 8
    $region109: #{forward.1} parent=1 // pred_fallthru
      _
    // Predicated region
    $region110: #{forward.1} parent=1 // pred_check
      _
    $region111: #{forward.1} parent=1 // pred_check_branch
      %234 = sbr.rel (0) target = $region113
    $region112: #{forward.1} parent=1 // pred_region
      %s236 = ssub.s32 16, 16
      %237 = vsyncadd [#allocation22], %s236
      %s239 = sshll.u32 [#allocation23], 4
      %s240 = int_to_ptr.vmem [resolvable:$true] %s239
      %242 = dma.hbm_to_vmem [thread:$0]  %s55, 16, %s240, [#allocation22]
    $region113: #{forward.1} parent=1 // pred_fallthru
      _
    // Predicated region
    $region114: #{forward.1} parent=1 // pred_check
      _
    $region115: #{forward.1} parent=1 // pred_check_branch
      %244 = sbr.rel (0) target = $region117
    $region116: #{forward.1} parent=1 // pred_region
      %s246 = ssub.s32 16, 16
      %247 = vsyncadd [#allocation25], %s246
      %s249 = sshll.u32 [#allocation24], 4
      %s250 = int_to_ptr.vmem [resolvable:$true] %s249
      %252 = dma.hbm_to_vmem [thread:$0]  %s57, 16, %s250, [#allocation25]
    $region117: #{forward.1} parent=1 // pred_fallthru
      _
    // Predicated region
    $region118: #{forward.1} parent=1 // pred_check
      _
    $region119: #{forward.1} parent=1 // pred_check_branch
      %254 = sbr.rel (0) target = $region121
    $region120: #{forward.1} parent=1 // pred_region
      _
    $region121: #{forward.1} parent=1 // pred_fallthru
      _
    // Predicated region
    $region122: #{forward.1} parent=1 // pred_check
      _
    $region123: #{forward.1} parent=1 // pred_check_branch
      %256 = sbr.rel (0) target = $region125
    $region124: #{forward.1} parent=1 // pred_region
      _
    $region125: #{forward.1} parent=1 // pred_fallthru
      _
    // Predicated region
    $region126: #{forward.1} parent=1 // pred_check
      _
    $region127: #{forward.1} parent=1 // pred_check_branch
      %258 = sbr.rel (0) target = $region129
    $region128: #{forward.1} parent=1 // pred_region
      %s260 = ssub.s32 16, 16
      %261 = vsyncadd [#allocation25], %s260
      %s263 = sshll.u32 [#allocation26], 4
      %s264 = int_to_ptr.vmem [resolvable:$true] %s263
      %266 = dma.hbm_to_vmem [thread:$0]  %s63, 16, %s264, [#allocation25]
    $region129: #{forward.1} parent=1 // pred_fallthru
      _
    // Predicated region
    $region130: #{forward.1} parent=1 // pred_check
      _
    $region131: #{forward.1} parent=1 // pred_check_branch
      %268 = sbr.rel (0) target = $region133
    $region132: #{forward.1} parent=1 // pred_region
      %269 = dma.done [#allocation4], 16
    $region133: #{forward.1} parent=1 // pred_fallthru
      _
    // Predicated region
    $region134: #{forward.1} parent=1 // pred_check
      _
    $region135: #{forward.1} parent=1 // pred_check_branch
      %271 = sbr.rel (0) target = $region137
    $region136: #{forward.1} parent=1 // pred_region
      %272 = dma.done [#allocation7], 16
    $region137: #{forward.1} parent=1 // pred_fallthru
      _
    // Predicated region
    $region138: #{forward.1} parent=1 // pred_check
      _
    $region139: #{forward.1} parent=1 // pred_check_branch
      %274 = sbr.rel (0) target = $region141
    $region140: #{forward.1} parent=1 // pred_region
      %275 = dma.done [#allocation7], 16
    $region141: #{forward.1} parent=1 // pred_fallthru
      _
    // Predicated region
    $region142: #{forward.1} parent=1 // pred_check
      _
    $region143: #{forward.1} parent=1 // pred_check_branch
      %277 = sbr.rel (0) target = $region145
    $region144: #{forward.1} parent=1 // pred_region
      %278 = dma.done [#allocation10], 16
    $region145: #{forward.1} parent=1 // pred_fallthru
      _
    // Predicated region
    $region146: #{forward.1} parent=1 // pred_check
      _
    $region147: #{forward.1} parent=1 // pred_check_branch
      %280 = sbr.rel (0) target = $region149
    $region148: #{forward.1} parent=1 // pred_region
      %281 = dma.done [#allocation10], 16
    $region149: #{forward.1} parent=1 // pred_fallthru
      _
    // Predicated region
    $region150: #{forward.1} parent=1 // pred_check
      _
    $region151: #{forward.1} parent=1 // pred_check_branch
      %283 = sbr.rel (0) target = $region153
    $region152: #{forward.1} parent=1 // pred_region
      %284 = dma.done [#allocation13], 16
    $region153: #{forward.1} parent=1 // pred_fallthru
      _
    // Predicated region
    $region154: #{forward.1} parent=1 // pred_check
      _
    $region155: #{forward.1} parent=1 // pred_check_branch
      %286 = sbr.rel (0) target = $region157
    $region156: #{forward.1} parent=1 // pred_region
      %287 = dma.done [#allocation13], 16
    $region157: #{forward.1} parent=1 // pred_fallthru
      _
    // Predicated region
    $region158: #{forward.1} parent=1 // pred_check
      _
    $region159: #{forward.1} parent=1 // pred_check_branch
      %289 = sbr.rel (0) target = $region161
    $region160: #{forward.1} parent=1 // pred_region
      %290 = dma.done [#allocation16], 16
    $region161: #{forward.1} parent=1 // pred_fallthru
      _
    // Predicated region
    $region162: #{forward.1} parent=1 // pred_check
      _
    $region163: #{forward.1} parent=1 // pred_check_branch
      %292 = sbr.rel (0) target = $region165
    $region164: #{forward.1} parent=1 // pred_region
      %293 = dma.done [#allocation16], 16
    $region165: #{forward.1} parent=1 // pred_fallthru
      _
    // Predicated region
    $region166: #{forward.1} parent=1 // pred_check
      _
    $region167: #{forward.1} parent=1 // pred_check_branch
      %295 = sbr.rel (0) target = $region169
    $region168: #{forward.1} parent=1 // pred_region
      %296 = dma.done [#allocation19], 16
    $region169: #{forward.1} parent=1 // pred_fallthru
      _
    // Predicated region
    $region170: #{forward.1} parent=1 // pred_check
      _
    $region171: #{forward.1} parent=1 // pred_check_branch
      %298 = sbr.rel (0) target = $region173
    $region172: #{forward.1} parent=1 // pred_region
      %299 = dma.done [#allocation19], 16
    $region173: #{forward.1} parent=1 // pred_fallthru
      _
    // Predicated region
    $region174: #{forward.1} parent=1 // pred_check
      _
    $region175: #{forward.1} parent=1 // pred_check_branch
      %301 = sbr.rel (0) target = $region177
    $region176: #{forward.1} parent=1 // pred_region
      %302 = dma.done [#allocation22], 512
    $region177: #{forward.1} parent=1 // pred_fallthru
      _
    // Predicated region
    $region178: #{forward.1} parent=1 // pred_check
      _
    $region179: #{forward.1} parent=1 // pred_check_branch
      %304 = sbr.rel (0) target = $region181
    $region180: #{forward.1} parent=1 // pred_region
      %305 = dma.done [#allocation22], 16
    $region181: #{forward.1} parent=1 // pred_fallthru
      _
    // Predicated region
    $region182: #{forward.1} parent=1 // pred_check
      _
    $region183: #{forward.1} parent=1 // pred_check_branch
      %307 = sbr.rel (0) target = $region185
    $region184: #{forward.1} parent=1 // pred_region
      %308 = dma.done [#allocation25], 16
    $region185: #{forward.1} parent=1 // pred_fallthru
      _
    // Predicated region
    $region186: #{forward.1} parent=1 // pred_check
      _
    $region187: #{forward.1} parent=1 // pred_check_branch
      %310 = sbr.rel (0) target = $region189
    $region188: #{forward.1} parent=1 // pred_region
      %311 = dma.done [#allocation25], 16
    $region189: #{forward.1} parent=1 // pred_fallthru
      _
    %v313 = vld [vmem:[%s1] sm:$0xff]
    %v314 = vld [vmem:[%s1 + $0x8] sm:$0xff]
    %v315 = vld [vmem:[%s1 + $0x10] sm:$0xff]
    %v316 = vld [vmem:[%s1 + $0x18] sm:$0xff]
    %vm317 = vcmask 523264
    %v318 = vsel %vm317, %v313, 0.0
    %319 = vadd.xlane.f32.xlu0 %v318
    %v320 = vpop.xlane.xlu0 %319
    %v321 = vsel %vm317, %v314, 0.0
    %322 = vadd.xlane.f32.xlu0 %v321
    %v323 = vpop.xlane.xlu0 %322
    %v324 = vsel %vm317, %v315, 0.0
    %325 = vadd.xlane.f32.xlu0 %v324
    %v326 = vpop.xlane.xlu0 %325
    %v327 = vsel %vm317, %v316, 0.0
    %328 = vadd.xlane.f32.xlu0 %v327
    %v329 = vpop.xlane.xlu0 %328
    %v330 = vadd.f32 %v320, %v323
    %v331 = vrot.slane %v330, 4
    %v332 = vadd.f32 %v330, %v331
    %v333 = vrot.slane %v332, 2
    %v334 = vadd.f32 %v332, %v333
    %v335 = vrot.slane %v334, 1
    %v336 = vadd.f32 %v334, %v335
    %v337 = vadd.f32 %v326, %v329
    %v338 = vrot.slane %v337, 4
    %v339 = vadd.f32 %v337, %v338
    %v340 = vrot.slane %v339, 2
    %v341 = vadd.f32 %v339, %v340
    %v342 = vrot.slane %v341, 1
    %v343 = vadd.f32 %v341, %v342
    %v344 = vmul.f32 %v336, 0.0009765625
    %v345 = vmul.f32 %v343, 0.0009765625
    %v346 = vsub.f32 %v313, %v344
    %v347 = vsub.f32 %v314, %v344
    %v348 = vsub.f32 %v315, %v345
    %v349 = vsub.f32 %v316, %v345
    %v350 = vmul.f32 %v346, %v346
    %v351 = vmul.f32 %v347, %v347
    %v352 = vmul.f32 %v348, %v348
    %v353 = vmul.f32 %v349, %v349
    %v354 = vsel %vm317, %v350, 0.0
    %355 = vadd.xlane.f32.xlu0 %v354
    %v356 = vpop.xlane.xlu0 %355
    %v357 = vsel %vm317, %v351, 0.0
    %358 = vadd.xlane.f32.xlu0 %v357
    %v359 = vpop.xlane.xlu0 %358
    %v360 = vsel %vm317, %v352, 0.0
    %361 = vadd.xlane.f32.xlu0 %v360
    %v362 = vpop.xlane.xlu0 %361
    %v363 = vsel %vm317, %v353, 0.0
    %364 = vadd.xlane.f32.xlu0 %v363
    %v365 = vpop.xlane.xlu0 %364
    %v366 = vadd.f32 %v356, %v359
    %v367 = vrot.slane %v366, 4
    %v368 = vadd.f32 %v366, %v367
    %v369 = vrot.slane %v368, 2
    %v370 = vadd.f32 %v368, %v369
    %v371 = vrot.slane %v370, 1
    %v372 = vadd.f32 %v370, %v371
    %v373 = vadd.f32 %v362, %v365
    %v374 = vrot.slane %v373, 4
    %v375 = vadd.f32 %v373, %v374
    %v376 = vrot.slane %v375, 2
    %v377 = vadd.f32 %v375, %v376
    %v378 = vrot.slane %v377, 1
    %v379 = vadd.f32 %v377, %v378
    %v380 = vmul.f32 %v372, 0.0009775171
    %v381 = vmul.f32 %v379, 0.0009775171
    %v382 = vrsqrt.pop %v380
    %v383 = vmul.f32 %v380, %v382
    %vm384 = vcmp.eq.f32.partialorder %v380, inf
    %v385 = vsel %vm384, %v380, %v383
    %vm386 = vcmp.eq.f32.partialorder %v380, 0.0
    %v387 = vand.u32 %v380, 2147483648
    %v388 = vsel %vm386, %v387, %v385
    %v389 = vrsqrt.pop %v381
    %v390 = vmul.f32 %v381, %v389
    %vm391 = vcmp.eq.f32.partialorder %v381, inf
    %v392 = vsel %vm391, %v381, %v390
    %vm393 = vcmp.eq.f32.partialorder %v381, 0.0
    %v394 = vand.u32 %v381, 2147483648
    %v395 = vsel %vm393, %v394, %v392
    %v396 = vadd.f32 %v388, 1e-05
    %v397 = vadd.f32 %v395, 1e-05
    %v398 = vrcp.pop %v396
    %v399 = vmul.f32 %v346, %v398
    %v400 = vmul.f32 %v347, %v398
    %v401 = vrcp.pop %v397
    %v402 = vmul.f32 %v348, %v401
    %v403 = vmul.f32 %v349, %v401
    %v404 = vld [vmem:[%s7] sm:$0xff]
    %v405 = vld [vmem:[%s7 + $0x8] sm:$0xff]
    %v406 = vld [vmem:[%s7 + $0x10] sm:$0xff]
    %v407 = vld [vmem:[%s7 + $0x18] sm:$0xff]
    %v408 = vld [vmem:[%s7 + $0x20] sm:$0xff]
    %v409 = vld [vmem:[%s7 + $0x28] sm:$0xff]
    %v410 = vld [vmem:[%s7 + $0x30] sm:$0xff]
    %v411 = vld [vmem:[%s7 + $0x38] sm:$0xff]
    %v412 = vpack.c.bf16 %v400, %v399
    %v413 = vpack.c.bf16 %v403, %v402
    %v414 = vpack.c.bf16 %v405, %v404
    %v415 = vpack.c.bf16 %v407, %v406
    %v416 = vpack.c.bf16 %v409, %v408
    %v417 = vpack.c.bf16 %v411, %v410
    %v418 = vld [vmem:[%s9] sm:$0x1]
    %v420 = vlaneseq
    %v421 = vshrl.u32 %v420, 7
    %v422 = vsub.s32 0, %v421
    %v423 = vrot.slane %v418, %v422
    %v426 = vsel %vm317, %v412, 0
    %v429 = vsel %vm317, %v413, 0
    %431 = vmatprep.subr.bf16.mxu0 0
    %432 = vmatpush1.bf16.msra.mxu0 %v414
    %433 = vmatprep.subr.bf16.mxu0 0
    %434 = vmatpush1.bf16.msra.mxu0 %v415
    %435 = vmatprep.subr.bf16.mxu0 0
    %436 = vmatpush1.bf16.msra.mxu0 %v416
    %437 = vmatprep.subr.bf16.mxu0 0
    %438 = vmatpush1.bf16.msra.mxu0 %v417
    %439 = vmatprep.subr.bf16.mxu0 0
    %440 = vmatpush1.bf16.msra.mxu0 0
    %441 = vmatprep.subr.bf16.mxu0 0
    %442 = vmatpush1.bf16.msra.mxu0 0
    %443 = vmatprep.subr.bf16.mxu0 0
    %444 = vmatpush1.bf16.msra.mxu0 0
    %445 = vmatprep.subr.bf16.mxu0 0
    %446 = vmatpush1.bf16.msra.mxu0 0
    %447 = vmatprep.subr.bf16.mxu0 0
    %448 = vmatpush1.bf16.msra.mxu0 0
    %449 = vmatprep.subr.bf16.mxu0 0
    %450 = vmatpush1.bf16.msra.mxu0 0
    %451 = vmatprep.subr.bf16.mxu0 0
    %452 = vmatpush1.bf16.msra.mxu0 0
    %453 = vmatprep.subr.bf16.mxu0 0
    %454 = vmatpush1.bf16.msra.mxu0 0
    %455 = vmatprep.subr.bf16.mxu0 0
    %456 = vmatpush1.bf16.msra.mxu0 0
    %457 = vmatprep.subr.bf16.mxu0 0
    %458 = vmatpush1.bf16.msra.mxu0 0
    %459 = vmatprep.subr.bf16.mxu0 0
    %460 = vmatpush1.bf16.msra.mxu0 0
    %461 = vmatprep.subr.bf16.mxu0 0
    %462 = vmatpush1.bf16.msra.mxu0 0
    %463 = vmatprep.mubr.bf16.mxu0 0
    %464 = vmatmul.mubr.bf16.gmra.mrb[0].mxu0 %v426
    %v465 = vpop.f32.mrb[0].mxu0
    %v466 = vadd.f32 %v423, %v465
    %v467 = vpop.f32.mrb[0].mxu0
    %v468 = vpop.f32.mrb[0].mxu0
    %v469 = vadd.f32 %v423, %v468
    %v470 = vpop.f32.mrb[0].mxu0
    %471 = vmatprep.mubr.bf16.mxu0 0
    %472 = vmatmul.mubr.bf16.gmra.mrb[0].mxu0 %v429
    %v473 = vpop.f32.mrb[0].mxu0
    %v474 = vadd.f32 %v423, %v473
    %v475 = vpop.f32.mrb[0].mxu0
    %v476 = vpop.f32.mrb[0].mxu0
    %v477 = vadd.f32 %v423, %v476
    %v478 = vpop.f32.mrb[0].mxu0
    %479 = vdwg.mxu0
    %v480 = vmax.f32 %v466, 0.0
    %v481 = vmax.f32 %v469, 0.0
    %v482 = vmax.f32 %v474, 0.0
    %v483 = vmax.f32 %v477, 0.0
    %v484 = vld [vmem:[%s3] sm:$0xff]
    %v485 = vld [vmem:[%s3 + $0x8] sm:$0xff]
    %v486 = vld [vmem:[%s3 + $0x10] sm:$0xff]
    %v487 = vld [vmem:[%s3 + $0x18] sm:$0xff]
    %vm488 = vcmask 261120
    %v490 = vsel %vm488, %v484, 0
    %v493 = vsel %vm488, %v485, 0
    %v496 = vsel %vm488, %v486, 0
    %v499 = vsel %vm488, %v487, 0
    %501 = vmatprep.subr.mxu0 0.0
    %502 = vmatpush1.msra.mxu0 %v480
    %503 = vmatprep.subr.mxu0 0.0
    %504 = vmatpush1.msra.mxu0 %v481
    %505 = vmatprep.subr.mxu0 0.0
    %506 = vmatpush1.msra.mxu0 %v482
    %507 = vmatprep.subr.mxu0 0.0
    %508 = vmatpush1.msra.mxu0 %v483
    %509 = vmatprep.subr.mxu0 0.0
    %510 = vmatpush1.msra.mxu0 0.0
    %511 = vmatprep.subr.mxu0 0.0
    %512 = vmatpush1.msra.mxu0 0.0
    %513 = vmatprep.subr.mxu0 0.0
    %514 = vmatpush1.msra.mxu0 0.0
    %515 = vmatprep.subr.mxu0 0.0
    %516 = vmatpush1.msra.mxu0 0.0
    %517 = vmatprep.subr.mxu0 0.0
    %518 = vmatpush1.msra.mxu0 0.0
    %519 = vmatprep.subr.mxu0 0.0
    %520 = vmatpush1.msra.mxu0 0.0
    %521 = vmatprep.subr.mxu0 0.0
    %522 = vmatpush1.msra.mxu0 0.0
    %523 = vmatprep.subr.mxu0 0.0
    %524 = vmatpush1.msra.mxu0 0.0
    %525 = vmatprep.subr.mxu0 0.0
    %526 = vmatpush1.msra.mxu0 0.0
    %527 = vmatprep.subr.mxu0 0.0
    %528 = vmatpush1.msra.mxu0 0.0
    %529 = vmatprep.subr.mxu0 0.0
    %530 = vmatpush1.msra.mxu0 0.0
    %531 = vmatprep.subr.mxu0 0.0
    %532 = vmatpush1.msra.mxu0 0.0
    %533 = vmatprep.subr.mxu0 0.0
    %534 = vmatpush1.msra.mxu0 0.0
    %535 = vmatprep.subr.mxu0 0.0
    %536 = vmatpush1.msra.mxu0 0.0
    %537 = vmatprep.subr.mxu0 0.0
    %538 = vmatpush1.msra.mxu0 0.0
    %539 = vmatprep.subr.mxu0 0.0
    %540 = vmatpush1.msra.mxu0 0.0
    %541 = vmatprep.subr.mxu0 0.0
    %542 = vmatpush1.msra.mxu0 0.0
    %543 = vmatprep.subr.mxu0 0.0
    %544 = vmatpush1.msra.mxu0 0.0
    %545 = vmatprep.subr.mxu0 0.0
    %546 = vmatpush1.msra.mxu0 0.0
    %547 = vmatprep.subr.mxu0 0.0
    %548 = vmatpush1.msra.mxu0 0.0
    %549 = vmatprep.subr.mxu0 0.0
    %550 = vmatpush1.msra.mxu0 0.0
    %551 = vmatprep.subr.mxu0 0.0
    %552 = vmatpush1.msra.mxu0 0.0
    %553 = vmatprep.subr.mxu0 0.0
    %554 = vmatpush1.msra.mxu0 0.0
    %555 = vmatprep.subr.mxu0 0.0
    %556 = vmatpush1.msra.mxu0 0.0
    %557 = vmatprep.subr.mxu0 0.0
    %558 = vmatpush1.msra.mxu0 0.0
    %559 = vmatprep.subr.mxu0 0.0
    %560 = vmatpush1.msra.mxu0 0.0
    %561 = vmatprep.subr.mxu0 0.0
    %562 = vmatpush1.msra.mxu0 0.0
    %563 = vmatprep.subr.mxu0 0.0
    %564 = vmatpush1.msra.mxu0 0.0
    %565 = vmatprep.mubr.f32.mxu0 0.0
    %566 = vmatmul.mubr.f32.gmra.mrb[0].mxu0 %v490
    %v567 = vpop.f32.mrb[0].mxu0
    %v568 = vadd.f32 0.0, %v567
    %v569 = vpop.f32.mrb[0].mxu0
    %570 = vmatprep.mubr.f32.mxu0 0.0
    %571 = vmatmul.mubr.f32.gmra.mrb[0].mxu0 %v493
    %v572 = vpop.f32.mrb[0].mxu0
    %v573 = vadd.f32 0.0, %v572
    %v574 = vpop.f32.mrb[0].mxu0
    %575 = vmatprep.mubr.f32.mxu0 0.0
    %576 = vmatmul.mubr.f32.gmra.mrb[0].mxu0 %v496
    %v577 = vpop.f32.mrb[0].mxu0
    %v578 = vadd.f32 0.0, %v577
    %v579 = vpop.f32.mrb[0].mxu0
    %580 = vmatprep.mubr.f32.mxu0 0.0
    %581 = vmatmul.mubr.f32.gmra.mrb[0].mxu0 %v499
    %v582 = vpop.f32.mrb[0].mxu0
    %v583 = vadd.f32 0.0, %v582
    %v584 = vpop.f32.mrb[0].mxu0
    %585 = vdwg.mxu0
    %v586 = vld [vmem:[%s5] sm:$0xff]
    %v587 = vld [vmem:[%s5 + $0x8] sm:$0xff]
    %v588 = vld [vmem:[%s5 + $0x10] sm:$0xff]
    %v589 = vld [vmem:[%s5 + $0x18] sm:$0xff]
    %v591 = vsel %vm488, %v586, 0
    %v594 = vsel %vm488, %v587, 0
    %v597 = vsel %vm488, %v588, 0
    %v600 = vsel %vm488, %v589, 0
    %602 = vmatprep.subr.mxu0 0.0
    %603 = vmatpush1.msra.mxu0 %v480
    %604 = vmatprep.subr.mxu0 0.0
    %605 = vmatpush1.msra.mxu0 %v481
    %606 = vmatprep.subr.mxu0 0.0
    %607 = vmatpush1.msra.mxu0 %v482
    %608 = vmatprep.subr.mxu0 0.0
    %609 = vmatpush1.msra.mxu0 %v483
    %610 = vmatprep.subr.mxu0 0.0
    %611 = vmatpush1.msra.mxu0 0.0
    %612 = vmatprep.subr.mxu0 0.0
    %613 = vmatpush1.msra.mxu0 0.0
    %614 = vmatprep.subr.mxu0 0.0
    %615 = vmatpush1.msra.mxu0 0.0
    %616 = vmatprep.subr.mxu0 0.0
    %617 = vmatpush1.msra.mxu0 0.0
    %618 = vmatprep.subr.mxu0 0.0
    %619 = vmatpush1.msra.mxu0 0.0
    %620 = vmatprep.subr.mxu0 0.0
    %621 = vmatpush1.msra.mxu0 0.0
    %622 = vmatprep.subr.mxu0 0.0
    %623 = vmatpush1.msra.mxu0 0.0
    %624 = vmatprep.subr.mxu0 0.0
    %625 = vmatpush1.msra.mxu0 0.0
    %626 = vmatprep.subr.mxu0 0.0
    %627 = vmatpush1.msra.mxu0 0.0
    %628 = vmatprep.subr.mxu0 0.0
    %629 = vmatpush1.msra.mxu0 0.0
    %630 = vmatprep.subr.mxu0 0.0
    %631 = vmatpush1.msra.mxu0 0.0
    %632 = vmatprep.subr.mxu0 0.0
    %633 = vmatpush1.msra.mxu0 0.0
    %634 = vmatprep.subr.mxu0 0.0
    %635 = vmatpush1.msra.mxu0 0.0
    %636 = vmatprep.subr.mxu0 0.0
    %637 = vmatpush1.msra.mxu0 0.0
    %638 = vmatprep.subr.mxu0 0.0
    %639 = vmatpush1.msra.mxu0 0.0
    %640 = vmatprep.subr.mxu0 0.0
    %641 = vmatpush1.msra.mxu0 0.0
    %642 = vmatprep.subr.mxu0 0.0
    %643 = vmatpush1.msra.mxu0 0.0
    %644 = vmatprep.subr.mxu0 0.0
    %645 = vmatpush1.msra.mxu0 0.0
    %646 = vmatprep.subr.mxu0 0.0
    %647 = vmatpush1.msra.mxu0 0.0
    %648 = vmatprep.subr.mxu0 0.0
    %649 = vmatpush1.msra.mxu0 0.0
    %650 = vmatprep.subr.mxu0 0.0
    %651 = vmatpush1.msra.mxu0 0.0
    %652 = vmatprep.subr.mxu0 0.0
    %653 = vmatpush1.msra.mxu0 0.0
    %654 = vmatprep.subr.mxu0 0.0
    %655 = vmatpush1.msra.mxu0 0.0
    %656 = vmatprep.subr.mxu0 0.0
    %657 = vmatpush1.msra.mxu0 0.0
    %658 = vmatprep.subr.mxu0 0.0
    %659 = vmatpush1.msra.mxu0 0.0
    %660 = vmatprep.subr.mxu0 0.0
    %661 = vmatpush1.msra.mxu0 0.0
    %662 = vmatprep.subr.mxu0 0.0
    %663 = vmatpush1.msra.mxu0 0.0
    %664 = vmatprep.subr.mxu0 0.0
    %665 = vmatpush1.msra.mxu0 0.0
    %666 = vmatprep.mubr.f32.mxu0 0.0
    %667 = vmatmul.mubr.f32.gmra.mrb[0].mxu0 %v591
    %v668 = vpop.f32.mrb[0].mxu0
    %v669 = vadd.f32 0.0, %v668
    %v670 = vpop.f32.mrb[0].mxu0
    %671 = vmatprep.mubr.f32.mxu0 0.0
    %672 = vmatmul.mubr.f32.gmra.mrb[0].mxu0 %v594
    %v673 = vpop.f32.mrb[0].mxu0
    %v674 = vadd.f32 0.0, %v673
    %v675 = vpop.f32.mrb[0].mxu0
    %676 = vmatprep.mubr.f32.mxu0 0.0
    %677 = vmatmul.mubr.f32.gmra.mrb[0].mxu0 %v597
    %v678 = vpop.f32.mrb[0].mxu0
    %v679 = vadd.f32 0.0, %v678
    %v680 = vpop.f32.mrb[0].mxu0
    %681 = vmatprep.mubr.f32.mxu0 0.0
    %682 = vmatmul.mubr.f32.gmra.mrb[0].mxu0 %v600
    %v683 = vpop.f32.mrb[0].mxu0
    %v684 = vadd.f32 0.0, %v683
    %v685 = vpop.f32.mrb[0].mxu0
    %686 = vdwg.mxu0
    %v687 = vld [vmem:[%s11] sm:$0x7]
    %v688 = vlaneseq
    %v689 = vshrl.u32 %v688, 7
    %v690 = vsub.s32 0, %v689
    %v691 = vrot.slane %v687, %v690
    %v692 = vmul.f32 %v691, %v568
    %v693 = vmul.f32 %v691, %v573
    %v694 = vmul.f32 %v691, %v578
    %v695 = vmul.f32 %v691, %v583
    %v696 = vlaneseq
    %v697 = vshrl.u32 %v696, 7
    %v698 = vsub.s32 1, %v697
    %v699 = vrot.slane %v687, %v698
    %v700 = vmul.f32 %v699, %v480
    %v701 = vmul.f32 %v699, %v481
    %v702 = vmul.f32 %v699, %v482
    %v703 = vmul.f32 %v699, %v483
    %v704 = vadd.f32 %v692, %v700
    %v705 = vadd.f32 %v693, %v701
    %v706 = vadd.f32 %v694, %v702
    %v707 = vadd.f32 %v695, %v703
    %v708 = vlaneseq
    %v709 = vshrl.u32 %v708, 7
    %v710 = vsub.s32 2, %v709
    %v711 = vrot.slane %v687, %v710
    %v712 = vmul.f32 %v711, %v669
    %v713 = vmul.f32 %v711, %v674
    %v714 = vmul.f32 %v711, %v679
    %v715 = vmul.f32 %v711, %v684
    %v716 = vadd.f32 %v704, %v712
    %v717 = vadd.f32 %v705, %v713
    %v718 = vadd.f32 %v706, %v714
    %v719 = vadd.f32 %v707, %v715
    %v720 = vld [vmem:[#allocation3] sm:$0x1]
    %v722 = vlaneseq
    %v723 = vshrl.u32 %v722, 7
    %v724 = vsub.s32 0, %v723
    %v725 = vrot.slane %v720, %v724
    %v727 = vadd.f32 %v716, %v725
    %v728 = vadd.f32 %v717, %v725
    %v729 = vadd.f32 %v718, %v725
    %v730 = vadd.f32 %v719, %v725
    %v731 = vld [vmem:[%s15] sm:$0xff]
    %v732 = vld [vmem:[%s15 + $0x8] sm:$0xff]
    %v733 = vld [vmem:[%s15 + $0x10] sm:$0xff]
    %v734 = vld [vmem:[%s15 + $0x18] sm:$0xff]
    %v735 = vld [vmem:[%s15 + $0x20] sm:$0xff]
    %v736 = vld [vmem:[%s15 + $0x28] sm:$0xff]
    %v737 = vld [vmem:[%s15 + $0x30] sm:$0xff]
    %v738 = vld [vmem:[%s15 + $0x38] sm:$0xff]
    %v739 = vpack.c.bf16 %v728, %v727
    %v740 = vpack.c.bf16 %v730, %v729
    %v741 = vpack.c.bf16 %v732, %v731
    %v742 = vpack.c.bf16 %v734, %v733
    %v743 = vpack.c.bf16 %v736, %v735
    %v744 = vpack.c.bf16 %v738, %v737
    %v745 = vld [vmem:[%s17] sm:$0x1]
    %v747 = vlaneseq
    %v748 = vshrl.u32 %v747, 7
    %v749 = vsub.s32 0, %v748
    %v750 = vrot.slane %v745, %v749
    %v753 = vsel %vm317, %v739, 0
    %v756 = vsel %vm317, %v740, 0
    %758 = vmatprep.subr.bf16.mxu0 0
    %759 = vmatpush1.bf16.msra.mxu0 %v741
    %760 = vmatprep.subr.bf16.mxu0 0
    %761 = vmatpush1.bf16.msra.mxu0 %v742
    %762 = vmatprep.subr.bf16.mxu0 0
    %763 = vmatpush1.bf16.msra.mxu0 %v743
    %764 = vmatprep.subr.bf16.mxu0 0
    %765 = vmatpush1.bf16.msra.mxu0 %v744
    %766 = vmatprep.subr.bf16.mxu0 0
    %767 = vmatpush1.bf16.msra.mxu0 0
    %768 = vmatprep.subr.bf16.mxu0 0
    %769 = vmatpush1.bf16.msra.mxu0 0
    %770 = vmatprep.subr.bf16.mxu0 0
    %771 = vmatpush1.bf16.msra.mxu0 0
    %772 = vmatprep.subr.bf16.mxu0 0
    %773 = vmatpush1.bf16.msra.mxu0 0
    %774 = vmatprep.subr.bf16.mxu0 0
    %775 = vmatpush1.bf16.msra.mxu0 0
    %776 = vmatprep.subr.bf16.mxu0 0
    %777 = vmatpush1.bf16.msra.mxu0 0
    %778 = vmatprep.subr.bf16.mxu0 0
    %779 = vmatpush1.bf16.msra.mxu0 0
    %780 = vmatprep.subr.bf16.mxu0 0
    %781 = vmatpush1.bf16.msra.mxu0 0
    %782 = vmatprep.subr.bf16.mxu0 0
    %783 = vmatpush1.bf16.msra.mxu0 0
    %784 = vmatprep.subr.bf16.mxu0 0
    %785 = vmatpush1.bf16.msra.mxu0 0
    %786 = vmatprep.subr.bf16.mxu0 0
    %787 = vmatpush1.bf16.msra.mxu0 0
    %788 = vmatprep.subr.bf16.mxu0 0
    %789 = vmatpush1.bf16.msra.mxu0 0
    %790 = vmatprep.mubr.bf16.mxu0 0
    %791 = vmatmul.mubr.bf16.gmra.mrb[0].mxu0 %v753
    %v792 = vpop.f32.mrb[0].mxu0
    %v793 = vadd.f32 %v750, %v792
    %v794 = vpop.f32.mrb[0].mxu0
    %v795 = vpop.f32.mrb[0].mxu0
    %v796 = vadd.f32 %v750, %v795
    %v797 = vpop.f32.mrb[0].mxu0
    %798 = vmatprep.mubr.bf16.mxu0 0
    %799 = vmatmul.mubr.bf16.gmra.mrb[0].mxu0 %v756
    %v800 = vpop.f32.mrb[0].mxu0
    %v801 = vadd.f32 %v750, %v800
    %v802 = vpop.f32.mrb[0].mxu0
    %v803 = vpop.f32.mrb[0].mxu0
    %v804 = vadd.f32 %v750, %v803
    %v805 = vpop.f32.mrb[0].mxu0
    %806 = vdwg.mxu0
    %v807 = vadd.f32 %v793, %v480
    %v808 = vadd.f32 %v796, %v481
    %v809 = vadd.f32 %v801, %v482
    %v810 = vadd.f32 %v804, %v483
    %v811 = vmax.f32 %v807, 0.0
    %v812 = vmax.f32 %v808, 0.0
    %v813 = vmax.f32 %v809, 0.0
    %v814 = vmax.f32 %v810, 0.0
    %v815 = vld [vmem:[%s19] sm:$0xff]
    %v816 = vld [vmem:[%s19 + $0x8] sm:$0xff]
    %v817 = vld [vmem:[%s19 + $0x10] sm:$0xff]
    %v818 = vld [vmem:[%s19 + $0x18] sm:$0xff]
    %v819 = vld [vmem:[%s19 + $0x20] sm:$0xff]
    %v820 = vld [vmem:[%s19 + $0x28] sm:$0xff]
    %v821 = vld [vmem:[%s19 + $0x30] sm:$0xff]
    %v822 = vld [vmem:[%s19 + $0x38] sm:$0xff]
    %v823 = vpack.c.bf16 %v812, %v811
    %v824 = vpack.c.bf16 %v814, %v813
    %v825 = vpack.c.bf16 %v816, %v815
    %v826 = vpack.c.bf16 %v818, %v817
    %v827 = vpack.c.bf16 %v820, %v819
    %v828 = vpack.c.bf16 %v822, %v821
    %v829 = vld [vmem:[#allocation6] sm:$0x1]
    %v831 = vlaneseq
    %v832 = vshrl.u32 %v831, 7
    %v833 = vsub.s32 0, %v832
    %v834 = vrot.slane %v829, %v833
    %v837 = vsel %vm317, %v823, 0
    %v840 = vsel %vm317, %v824, 0
    %842 = vmatprep.subr.bf16.mxu0 0
    %843 = vmatpush1.bf16.msra.mxu0 %v825
    %844 = vmatprep.subr.bf16.mxu0 0
    %845 = vmatpush1.bf16.msra.mxu0 %v826
    %846 = vmatprep.subr.bf16.mxu0 0
    %847 = vmatpush1.bf16.msra.mxu0 %v827
    %848 = vmatprep.subr.bf16.mxu0 0
    %849 = vmatpush1.bf16.msra.mxu0 %v828
    %850 = vmatprep.subr.bf16.mxu0 0
    %851 = vmatpush1.bf16.msra.mxu0 0
    %852 = vmatprep.subr.bf16.mxu0 0
    %853 = vmatpush1.bf16.msra.mxu0 0
    %854 = vmatprep.subr.bf16.mxu0 0
    %855 = vmatpush1.bf16.msra.mxu0 0
    %856 = vmatprep.subr.bf16.mxu0 0
    %857 = vmatpush1.bf16.msra.mxu0 0
    %858 = vmatprep.subr.bf16.mxu0 0
    %859 = vmatpush1.bf16.msra.mxu0 0
    %860 = vmatprep.subr.bf16.mxu0 0
    %861 = vmatpush1.bf16.msra.mxu0 0
    %862 = vmatprep.subr.bf16.mxu0 0
    %863 = vmatpush1.bf16.msra.mxu0 0
    %864 = vmatprep.subr.bf16.mxu0 0
    %865 = vmatpush1.bf16.msra.mxu0 0
    %866 = vmatprep.subr.bf16.mxu0 0
    %867 = vmatpush1.bf16.msra.mxu0 0
    %868 = vmatprep.subr.bf16.mxu0 0
    %869 = vmatpush1.bf16.msra.mxu0 0
    %870 = vmatprep.subr.bf16.mxu0 0
    %871 = vmatpush1.bf16.msra.mxu0 0
    %872 = vmatprep.subr.bf16.mxu0 0
    %873 = vmatpush1.bf16.msra.mxu0 0
    %874 = vmatprep.mubr.bf16.mxu0 0
    %875 = vmatmul.mubr.bf16.gmra.mrb[0].mxu0 %v837
    %v876 = vpop.f32.mrb[0].mxu0
    %v877 = vadd.f32 %v834, %v876
    %v878 = vpop.f32.mrb[0].mxu0
    %v879 = vpop.f32.mrb[0].mxu0
    %v880 = vadd.f32 %v834, %v879
    %v881 = vpop.f32.mrb[0].mxu0
    %882 = vmatprep.mubr.bf16.mxu0 0
    %883 = vmatmul.mubr.bf16.gmra.mrb[0].mxu0 %v840
    %v884 = vpop.f32.mrb[0].mxu0
    %v885 = vadd.f32 %v834, %v884
    %v886 = vpop.f32.mrb[0].mxu0
    %v887 = vpop.f32.mrb[0].mxu0
    %v888 = vadd.f32 %v834, %v887
    %v889 = vpop.f32.mrb[0].mxu0
    %890 = vdwg.mxu0
    %v891 = vlaneseq
    %v892 = vshrl.u32 %v891, 7
    %v893 = vadd.s32 %v892, 8
    %v894 = vcvt.s32.f32 %v892
    %v895 = vcvt.s32.f32 %v893
    %v896 = vmul.f32 %v894, 0.0625
    %v897 = vmul.f32 %v895, 0.0625
    %v898 = vld [vmem:[%s23] sm:$0xff]
    %v899 = vld [vmem:[%s23 + $0x8] sm:$0xff]
    %v900 = vld [vmem:[%s23 + $0x10] sm:$0xff]
    %v901 = vld [vmem:[%s23 + $0x18] sm:$0xff]
    %v902 = vpack.c.bf16 %v880, %v877
    %v903 = vpack.c.bf16 %v888, %v885
    %v904 = vpack.c.bf16 %v899, %v898
    %v905 = vpack.c.bf16 %v901, %v900
    %v906 = vld [vmem:[#allocation8] sm:$0x1]
    %v908 = vlaneseq
    %v909 = vshrl.u32 %v908, 7
    %v910 = vsub.s32 0, %v909
    %v911 = vrot.slane %v906, %v910
    %v913 = vmul.f32 %v896, %v911
    %v914 = vmul.f32 %v897, %v911
    %v916 = vsel %vm488, %v902, 0
    %v919 = vsel %vm488, %v903, 0
    %921 = vmatprep.subr.bf16.mxu0 0
    %922 = vmatpush1.bf16.msra.mxu0 %v904
    %923 = vmatprep.subr.bf16.mxu0 0
    %924 = vmatpush1.bf16.msra.mxu0 %v905
    %925 = vmatprep.subr.bf16.mxu0 0
    %926 = vmatpush1.bf16.msra.mxu0 0
    %927 = vmatprep.subr.bf16.mxu0 0
    %928 = vmatpush1.bf16.msra.mxu0 0
    %929 = vmatprep.subr.bf16.mxu0 0
    %930 = vmatpush1.bf16.msra.mxu0 0
    %931 = vmatprep.subr.bf16.mxu0 0
    %932 = vmatpush1.bf16.msra.mxu0 0
    %933 = vmatprep.subr.bf16.mxu0 0
    %934 = vmatpush1.bf16.msra.mxu0 0
    %935 = vmatprep.subr.bf16.mxu0 0
    %936 = vmatpush1.bf16.msra.mxu0 0
    %937 = vmatprep.subr.bf16.mxu0 0
    %938 = vmatpush1.bf16.msra.mxu0 0
    %939 = vmatprep.subr.bf16.mxu0 0
    %940 = vmatpush1.bf16.msra.mxu0 0
    %941 = vmatprep.subr.bf16.mxu0 0
    %942 = vmatpush1.bf16.msra.mxu0 0
    %943 = vmatprep.subr.bf16.mxu0 0
    %944 = vmatpush1.bf16.msra.mxu0 0
    %945 = vmatprep.subr.bf16.mxu0 0
    %946 = vmatpush1.bf16.msra.mxu0 0
    %947 = vmatprep.subr.bf16.mxu0 0
    %948 = vmatpush1.bf16.msra.mxu0 0
    %949 = vmatprep.subr.bf16.mxu0 0
    %950 = vmatpush1.bf16.msra.mxu0 0
    %951 = vmatprep.subr.bf16.mxu0 0
    %952 = vmatpush1.bf16.msra.mxu0 0
    %953 = vmatprep.mubr.bf16.mxu0 0
    %954 = vmatmul.mubr.bf16.gmra.mrb[0].mxu0 %v916
    %v955 = vpop.f32.mrb[0].mxu0
    %v956 = vadd.f32 %v913, %v955
    %v957 = vpop.f32.mrb[0].mxu0
    %v958 = vpop.f32.mrb[0].mxu0
    %v959 = vadd.f32 %v914, %v958
    %v960 = vpop.f32.mrb[0].mxu0
    %961 = vmatprep.mubr.bf16.mxu0 0
    %962 = vmatmul.mubr.bf16.gmra.mrb[0].mxu0 %v919
    %v963 = vpop.f32.mrb[0].mxu0
    %v964 = vadd.f32 %v913, %v963
    %v965 = vpop.f32.mrb[0].mxu0
    %v966 = vpop.f32.mrb[0].mxu0
    %v967 = vadd.f32 %v914, %v966
    %v968 = vpop.f32.mrb[0].mxu0
    %969 = vdwg.mxu0
    %v970 = vld [vmem:[#allocation9] sm:$0x1]
    %v972 = vlaneseq
    %v973 = vshrl.u32 %v972, 7
    %v974 = vsub.s32 0, %v973
    %v975 = vrot.slane %v970, %v974
    %v977 = vadd.f32 %v956, %v975
    %v978 = vadd.f32 %v959, %v975
    %v979 = vadd.f32 %v964, %v975
    %v980 = vadd.f32 %v967, %v975
    %v981 = vld [vmem:[%s29] sm:$0xff]
    %v982 = vld [vmem:[%s29 + $0x8] sm:$0xff]
    %v983 = vld [vmem:[%s29 + $0x10] sm:$0xff]
    %v984 = vld [vmem:[%s29 + $0x18] sm:$0xff]
    %v985 = vpack.c.bf16 %v978, %v977
    %v986 = vpack.c.bf16 %v980, %v979
    %v987 = vpack.c.bf16 %v982, %v981
    %v988 = vpack.c.bf16 %v984, %v983
    %v989 = vld [vmem:[#allocation11] sm:$0x1]
    %v991 = vlaneseq
    %v992 = vshrl.u32 %v991, 7
    %v993 = vsub.s32 0, %v992
    %v994 = vrot.slane %v989, %v993
    %v997 = vsel %vm488, %v985, 0
    %v1000 = vsel %vm488, %v986, 0
    %1002 = vmatprep.subr.bf16.mxu0 0
    %1003 = vmatpush1.bf16.msra.mxu0 %v987
    %1004 = vmatprep.subr.bf16.mxu0 0
    %1005 = vmatpush1.bf16.msra.mxu0 %v988
    %1006 = vmatprep.subr.bf16.mxu0 0
    %1007 = vmatpush1.bf16.msra.mxu0 0
    %1008 = vmatprep.subr.bf16.mxu0 0
    %1009 = vmatpush1.bf16.msra.mxu0 0
    %1010 = vmatprep.subr.bf16.mxu0 0
    %1011 = vmatpush1.bf16.msra.mxu0 0
    %1012 = vmatprep.subr.bf16.mxu0 0
    %1013 = vmatpush1.bf16.msra.mxu0 0
    %1014 = vmatprep.subr.bf16.mxu0 0
    %1015 = vmatpush1.bf16.msra.mxu0 0
    %1016 = vmatprep.subr.bf16.mxu0 0
    %1017 = vmatpush1.bf16.msra.mxu0 0
    %1018 = vmatprep.subr.bf16.mxu0 0
    %1019 = vmatpush1.bf16.msra.mxu0 0
    %1020 = vmatprep.subr.bf16.mxu0 0
    %1021 = vmatpush1.bf16.msra.mxu0 0
    %1022 = vmatprep.subr.bf16.mxu0 0
    %1023 = vmatpush1.bf16.msra.mxu0 0
    %1024 = vmatprep.subr.bf16.mxu0 0
    %1025 = vmatpush1.bf16.msra.mxu0 0
    %1026 = vmatprep.subr.bf16.mxu0 0
    %1027 = vmatpush1.bf16.msra.mxu0 0
    %1028 = vmatprep.subr.bf16.mxu0 0
    %1029 = vmatpush1.bf16.msra.mxu0 0
    %1030 = vmatprep.subr.bf16.mxu0 0
    %1031 = vmatpush1.bf16.msra.mxu0 0
    %1032 = vmatprep.subr.bf16.mxu0 0
    %1033 = vmatpush1.bf16.msra.mxu0 0
    %1034 = vmatprep.mubr.bf16.mxu0 0
    %1035 = vmatmul.mubr.bf16.gmra.mrb[0].mxu0 %v997
    %v1036 = vpop.f32.mrb[0].mxu0
    %v1037 = vadd.f32 %v994, %v1036
    %v1038 = vpop.f32.mrb[0].mxu0
    %v1039 = vpop.f32.mrb[0].mxu0
    %v1040 = vadd.f32 %v994, %v1039
    %v1041 = vpop.f32.mrb[0].mxu0
    %1042 = vmatprep.mubr.bf16.mxu0 0
    %1043 = vmatmul.mubr.bf16.gmra.mrb[0].mxu0 %v1000
    %v1044 = vpop.f32.mrb[0].mxu0
    %v1045 = vadd.f32 %v994, %v1044
    %v1046 = vpop.f32.mrb[0].mxu0
    %v1047 = vpop.f32.mrb[0].mxu0
    %v1048 = vadd.f32 %v994, %v1047
    %v1049 = vpop.f32.mrb[0].mxu0
    %1050 = vdwg.mxu0
    %v1051 = vpack.c.bf16 %v1040, %v1037
    %v1052 = vpack.c.bf16 %v1048, %v1045
    %1054 = vrot.lane.b32.xlu0 %v1051, 96
    %v1055 = vpop.permute.xlu0 %1054
    %vm1056 = vcmask 130048
    %v1058 = vsel %vm1056, %v1051, 0
    %v1061 = vsel %vm1056, %v1055, 0
    %1063 = vmatprep.subr.bf16.mxu0 0
    %1064 = vmatpush1.bf16.xpose.msra.mxu0 %v1061
    %1065 = vmatprep.subr.bf16.mxu0 0
    %1066 = vmatpush1.bf16.xpose.msra.mxu0 0
    %1067 = vmatprep.subr.bf16.mxu0 0
    %1068 = vmatpush1.bf16.xpose.msra.mxu0 0
    %1069 = vmatprep.subr.bf16.mxu0 0
    %1070 = vmatpush1.bf16.xpose.msra.mxu0 0
    %1071 = vmatprep.subr.bf16.mxu0 0
    %1072 = vmatpush1.bf16.xpose.msra.mxu0 0
    %1073 = vmatprep.subr.bf16.mxu0 0
    %1074 = vmatpush1.bf16.xpose.msra.mxu0 0
    %1075 = vmatprep.subr.bf16.mxu0 0
    %1076 = vmatpush1.bf16.xpose.msra.mxu0 0
    %1077 = vmatprep.subr.bf16.mxu0 0
    %1078 = vmatpush1.bf16.xpose.msra.mxu0 0
    %1079 = vmatprep.subr.bf16.mxu0 0
    %1080 = vmatpush1.bf16.xpose.msra.mxu0 0
    %1081 = vmatprep.subr.bf16.mxu0 0
    %1082 = vmatpush1.bf16.xpose.msra.mxu0 0
    %1083 = vmatprep.subr.bf16.mxu0 0
    %1084 = vmatpush1.bf16.xpose.msra.mxu0 0
    %1085 = vmatprep.subr.bf16.mxu0 0
    %1086 = vmatpush1.bf16.xpose.msra.mxu0 0
    %1087 = vmatprep.subr.bf16.mxu0 0
    %1088 = vmatpush1.bf16.xpose.msra.mxu0 0
    %1089 = vmatprep.subr.bf16.mxu0 0
    %1090 = vmatpush1.bf16.xpose.msra.mxu0 0
    %1091 = vmatprep.subr.bf16.mxu0 0
    %1092 = vmatpush1.bf16.xpose.msra.mxu0 0
    %1093 = vmatprep.subr.bf16.mxu0 0
    %1094 = vmatpush1.bf16.xpose.msra.mxu0 0
    %1095 = vmatprep.mubr.bf16.mxu0 0
    %1096 = vmatmul.mubr.bf16.gmra.mrb[0].mxu0 %v1058
    %v1097 = vpop.f32.mrb[0].mxu0
    %v1098 = vadd.f32 0.0, %v1097
    %v1099 = vpop.f32.mrb[0].mxu0
    %v1100 = vpop.f32.mrb[0].mxu0
    %v1101 = vadd.f32 0.0, %v1100
    %v1102 = vpop.f32.mrb[0].mxu0
    %1103 = vdwg.mxu0
    %1105 = vrot.lane.b32.xlu0 %v1052, 96
    %v1106 = vpop.permute.xlu0 %1105
    %v1108 = vsel %vm1056, %v1052, 0
    %v1111 = vsel %vm1056, %v1106, 0
    %1113 = vmatprep.subr.bf16.mxu0 0
    %1114 = vmatpush1.bf16.xpose.msra.mxu0 %v1111
    %1115 = vmatprep.subr.bf16.mxu0 0
    %1116 = vmatpush1.bf16.xpose.msra.mxu0 0
    %1117 = vmatprep.subr.bf16.mxu0 0
    %1118 = vmatpush1.bf16.xpose.msra.mxu0 0
    %1119 = vmatprep.subr.bf16.mxu0 0
    %1120 = vmatpush1.bf16.xpose.msra.mxu0 0
    %1121 = vmatprep.subr.bf16.mxu0 0
    %1122 = vmatpush1.bf16.xpose.msra.mxu0 0
    %1123 = vmatprep.subr.bf16.mxu0 0
    %1124 = vmatpush1.bf16.xpose.msra.mxu0 0
    %1125 = vmatprep.subr.bf16.mxu0 0
    %1126 = vmatpush1.bf16.xpose.msra.mxu0 0
    %1127 = vmatprep.subr.bf16.mxu0 0
    %1128 = vmatpush1.bf16.xpose.msra.mxu0 0
    %1129 = vmatprep.subr.bf16.mxu0 0
    %1130 = vmatpush1.bf16.xpose.msra.mxu0 0
    %1131 = vmatprep.subr.bf16.mxu0 0
    %1132 = vmatpush1.bf16.xpose.msra.mxu0 0
    %1133 = vmatprep.subr.bf16.mxu0 0
    %1134 = vmatpush1.bf16.xpose.msra.mxu0 0
    %1135 = vmatprep.subr.bf16.mxu0 0
    %1136 = vmatpush1.bf16.xpose.msra.mxu0 0
    %1137 = vmatprep.subr.bf16.mxu0 0
    %1138 = vmatpush1.bf16.xpose.msra.mxu0 0
    %1139 = vmatprep.subr.bf16.mxu0 0
    %1140 = vmatpush1.bf16.xpose.msra.mxu0 0
    %1141 = vmatprep.subr.bf16.mxu0 0
    %1142 = vmatpush1.bf16.xpose.msra.mxu0 0
    %1143 = vmatprep.subr.bf16.mxu0 0
    %1144 = vmatpush1.bf16.xpose.msra.mxu0 0
    %1145 = vmatprep.mubr.bf16.mxu0 0
    %1146 = vmatmul.mubr.bf16.gmra.mrb[0].mxu0 %v1108
    %v1147 = vpop.f32.mrb[0].mxu0
    %v1148 = vadd.f32 0.0, %v1147
    %v1149 = vpop.f32.mrb[0].mxu0
    %v1150 = vpop.f32.mrb[0].mxu0
    %v1151 = vadd.f32 0.0, %v1150
    %v1152 = vpop.f32.mrb[0].mxu0
    %1153 = vdwg.mxu0
    %v1154 = vmul.f32 %v1098, 0.25
    %v1155 = vmul.f32 %v1101, 0.25
    %v1156 = vmul.f32 %v1148, 0.25
    %v1157 = vmul.f32 %v1151, 0.25
    %v1158 = vsel %vm1056, %v1154, -inf
    %1159 = vmax.xlane.f32.xlu0 %v1158
    %v1160 = vpop.xlane.xlu0 %1159
    %v1161 = vsel %vm1056, %v1155, -inf
    %1162 = vmax.xlane.f32.xlu0 %v1161
    %v1163 = vpop.xlane.xlu0 %1162
    %v1164 = vsel %vm1056, %v1156, -inf
    %1165 = vmax.xlane.f32.xlu0 %v1164
    %v1166 = vpop.xlane.xlu0 %1165
    %v1167 = vsel %vm1056, %v1157, -inf
    %1168 = vmax.xlane.f32.xlu0 %v1167
    %v1169 = vpop.xlane.xlu0 %1168
    %v1170 = vsub.f32 %v1154, %v1160
    %v1171 = vsub.f32 %v1155, %v1163
    %v1172 = vsub.f32 %v1156, %v1166
    %v1173 = vsub.f32 %v1157, %v1169
    %v1174 = vmul.f32 %v1170, 1.442695
    %v1175 = vpow.pop %v1174
    %v1176 = vmul.f32 %v1171, 1.442695
    %v1177 = vpow.pop %v1176
    %v1178 = vmul.f32 %v1172, 1.442695
    %v1179 = vpow.pop %v1178
    %v1180 = vmul.f32 %v1173, 1.442695
    %v1181 = vpow.pop %v1180
    %v1182 = vsel %vm1056, %v1175, 0.0
    %1183 = vadd.xlane.f32.xlu0 %v1182
    %v1184 = vpop.xlane.xlu0 %1183
    %v1185 = vsel %vm1056, %v1177, 0.0
    %1186 = vadd.xlane.f32.xlu0 %v1185
    %v1187 = vpop.xlane.xlu0 %1186
    %v1188 = vsel %vm1056, %v1179, 0.0
    %1189 = vadd.xlane.f32.xlu0 %v1188
    %v1190 = vpop.xlane.xlu0 %1189
    %v1191 = vsel %vm1056, %v1181, 0.0
    %1192 = vadd.xlane.f32.xlu0 %v1191
    %v1193 = vpop.xlane.xlu0 %1192
    %v1194 = vrcp.pop %v1184
    %v1195 = vrcp.pop %v1187
    %v1196 = vrcp.pop %v1190
    %v1197 = vrcp.pop %v1193
    %v1198 = vmul.f32 %v1175, %v1194
    %v1199 = vmul.f32 %v1177, %v1195
    %v1200 = vmul.f32 %v1179, %v1196
    %v1201 = vmul.f32 %v1181, %v1197
    %v1202 = vpack.c.bf16 %v1199, %v1198
    %v1203 = vpack.c.bf16 %v1201, %v1200
    %1204 = vrot.lane.b32.xlu0 %v1051, 64
    %v1205 = vpop.permute.xlu0 %1204
    %v1208 = vsel %vm1056, %v1202, 0
    %1210 = vmatprep.subr.bf16.mxu0 0
    %1211 = vmatpush1.bf16.msra.mxu0 %v1205
    %1212 = vmatprep.subr.bf16.mxu0 0
    %1213 = vmatpush1.bf16.msra.mxu0 0
    %1214 = vmatprep.subr.bf16.mxu0 0
    %1215 = vmatpush1.bf16.msra.mxu0 0
    %1216 = vmatprep.subr.bf16.mxu0 0
    %1217 = vmatpush1.bf16.msra.mxu0 0
    %1218 = vmatprep.subr.bf16.mxu0 0
    %1219 = vmatpush1.bf16.msra.mxu0 0
    %1220 = vmatprep.subr.bf16.mxu0 0
    %1221 = vmatpush1.bf16.msra.mxu0 0
    %1222 = vmatprep.subr.bf16.mxu0 0
    %1223 = vmatpush1.bf16.msra.mxu0 0
    %1224 = vmatprep.subr.bf16.mxu0 0
    %1225 = vmatpush1.bf16.msra.mxu0 0
    %1226 = vmatprep.subr.bf16.mxu0 0
    %1227 = vmatpush1.bf16.msra.mxu0 0
    %1228 = vmatprep.subr.bf16.mxu0 0
    %1229 = vmatpush1.bf16.msra.mxu0 0
    %1230 = vmatprep.subr.bf16.mxu0 0
    %1231 = vmatpush1.bf16.msra.mxu0 0
    %1232 = vmatprep.subr.bf16.mxu0 0
    %1233 = vmatpush1.bf16.msra.mxu0 0
    %1234 = vmatprep.subr.bf16.mxu0 0
    %1235 = vmatpush1.bf16.msra.mxu0 0
    %1236 = vmatprep.subr.bf16.mxu0 0
    %1237 = vmatpush1.bf16.msra.mxu0 0
    %1238 = vmatprep.subr.bf16.mxu0 0
    %1239 = vmatpush1.bf16.msra.mxu0 0
    %1240 = vmatprep.subr.bf16.mxu0 0
    %1241 = vmatpush1.bf16.msra.mxu0 0
    %1242 = vmatprep.mubr.bf16.mxu0 0
    %1243 = vmatmul.mubr.bf16.gmra.mrb[0].mxu0 %v1208
    %v1244 = vpop.f32.mrb[0].mxu0
    %v1245 = vadd.f32 0.0, %v1244
    %v1246 = vpop.f32.mrb[0].mxu0
    %v1247 = vpop.f32.mrb[0].mxu0
    %v1248 = vadd.f32 0.0, %v1247
    %v1249 = vpop.f32.mrb[0].mxu0
    %1250 = vdwg.mxu0
    %1251 = vrot.lane.b32.xlu0 %v1052, 64
    %v1252 = vpop.permute.xlu0 %1251
    %v1255 = vsel %vm1056, %v1203, 0
    %1257 = vmatprep.subr.bf16.mxu0 0
    %1258 = vmatpush1.bf16.msra.mxu0 %v1252
    %1259 = vmatprep.subr.bf16.mxu0 0
    %1260 = vmatpush1.bf16.msra.mxu0 0
    %1261 = vmatprep.subr.bf16.mxu0 0
    %1262 = vmatpush1.bf16.msra.mxu0 0
    %1263 = vmatprep.subr.bf16.mxu0 0
    %1264 = vmatpush1.bf16.msra.mxu0 0
    %1265 = vmatprep.subr.bf16.mxu0 0
    %1266 = vmatpush1.bf16.msra.mxu0 0
    %1267 = vmatprep.subr.bf16.mxu0 0
    %1268 = vmatpush1.bf16.msra.mxu0 0
    %1269 = vmatprep.subr.bf16.mxu0 0
    %1270 = vmatpush1.bf16.msra.mxu0 0
    %1271 = vmatprep.subr.bf16.mxu0 0
    %1272 = vmatpush1.bf16.msra.mxu0 0
    %1273 = vmatprep.subr.bf16.mxu0 0
    %1274 = vmatpush1.bf16.msra.mxu0 0
    %1275 = vmatprep.subr.bf16.mxu0 0
    %1276 = vmatpush1.bf16.msra.mxu0 0
    %1277 = vmatprep.subr.bf16.mxu0 0
    %1278 = vmatpush1.bf16.msra.mxu0 0
    %1279 = vmatprep.subr.bf16.mxu0 0
    %1280 = vmatpush1.bf16.msra.mxu0 0
    %1281 = vmatprep.subr.bf16.mxu0 0
    %1282 = vmatpush1.bf16.msra.mxu0 0
    %1283 = vmatprep.subr.bf16.mxu0 0
    %1284 = vmatpush1.bf16.msra.mxu0 0
    %1285 = vmatprep.subr.bf16.mxu0 0
    %1286 = vmatpush1.bf16.msra.mxu0 0
    %1287 = vmatprep.subr.bf16.mxu0 0
    %1288 = vmatpush1.bf16.msra.mxu0 0
    %1289 = vmatprep.mubr.bf16.mxu0 0
    %1290 = vmatmul.mubr.bf16.gmra.mrb[0].mxu0 %v1255
    %v1291 = vpop.f32.mrb[0].mxu0
    %v1292 = vadd.f32 0.0, %v1291
    %v1293 = vpop.f32.mrb[0].mxu0
    %v1294 = vpop.f32.mrb[0].mxu0
    %v1295 = vadd.f32 0.0, %v1294
    %v1296 = vpop.f32.mrb[0].mxu0
    %1297 = vdwg.mxu0
    %1298 = vrot.lane.b32.xlu0 %v1051, 112
    %v1299 = vpop.permute.xlu0 %1298
    %1300 = vrot.lane.b32.xlu0 %v1051, 80
    %v1301 = vpop.permute.xlu0 %1300
    %v1303 = vsel %vm1056, %v1299, 0
    %v1306 = vsel %vm1056, %v1301, 0
    %1308 = vmatprep.subr.bf16.mxu0 0
    %1309 = vmatpush1.bf16.xpose.msra.mxu0 %v1306
    %1310 = vmatprep.subr.bf16.mxu0 0
    %1311 = vmatpush1.bf16.xpose.msra.mxu0 0
    %1312 = vmatprep.subr.bf16.mxu0 0
    %1313 = vmatpush1.bf16.xpose.msra.mxu0 0
    %1314 = vmatprep.subr.bf16.mxu0 0
    %1315 = vmatpush1.bf16.xpose.msra.mxu0 0
    %1316 = vmatprep.subr.bf16.mxu0 0
    %1317 = vmatpush1.bf16.xpose.msra.mxu0 0
    %1318 = vmatprep.subr.bf16.mxu0 0
    %1319 = vmatpush1.bf16.xpose.msra.mxu0 0
    %1320 = vmatprep.subr.bf16.mxu0 0
    %1321 = vmatpush1.bf16.xpose.msra.mxu0 0
    %1322 = vmatprep.subr.bf16.mxu0 0
    %1323 = vmatpush1.bf16.xpose.msra.mxu0 0
    %1324 = vmatprep.subr.bf16.mxu0 0
    %1325 = vmatpush1.bf16.xpose.msra.mxu0 0
    %1326 = vmatprep.subr.bf16.mxu0 0
    %1327 = vmatpush1.bf16.xpose.msra.mxu0 0
    %1328 = vmatprep.subr.bf16.mxu0 0
    %1329 = vmatpush1.bf16.xpose.msra.mxu0 0
    %1330 = vmatprep.subr.bf16.mxu0 0
    %1331 = vmatpush1.bf16.xpose.msra.mxu0 0
    %1332 = vmatprep.subr.bf16.mxu0 0
    %1333 = vmatpush1.bf16.xpose.msra.mxu0 0
    %1334 = vmatprep.subr.bf16.mxu0 0
    %1335 = vmatpush1.bf16.xpose.msra.mxu0 0
    %1336 = vmatprep.subr.bf16.mxu0 0
    %1337 = vmatpush1.bf16.xpose.msra.mxu0 0
    %1338 = vmatprep.subr.bf16.mxu0 0
    %1339 = vmatpush1.bf16.xpose.msra.mxu0 0
    %1340 = vmatprep.mubr.bf16.mxu0 0
    %1341 = vmatmul.mubr.bf16.gmra.mrb[0].mxu0 %v1303
    %v1342 = vpop.f32.mrb[0].mxu0
    %v1343 = vadd.f32 0.0, %v1342
    %v1344 = vpop.f32.mrb[0].mxu0
    %v1345 = vpop.f32.mrb[0].mxu0
    %v1346 = vadd.f32 0.0, %v1345
    %v1347 = vpop.f32.mrb[0].mxu0
    %1348 = vdwg.mxu0
    %1349 = vrot.lane.b32.xlu0 %v1052, 112
    %v1350 = vpop.permute.xlu0 %1349
    %1351 = vrot.lane.b32.xlu0 %v1052, 80
    %v1352 = vpop.permute.xlu0 %1351
    %v1354 = vsel %vm1056, %v1350, 0
    %v1357 = vsel %vm1056, %v1352, 0
    %1359 = vmatprep.subr.bf16.mxu0 0
    %1360 = vmatpush1.bf16.xpose.msra.mxu0 %v1357
    %1361 = vmatprep.subr.bf16.mxu0 0
    %1362 = vmatpush1.bf16.xpose.msra.mxu0 0
    %1363 = vmatprep.subr.bf16.mxu0 0
    %1364 = vmatpush1.bf16.xpose.msra.mxu0 0
    %1365 = vmatprep.subr.bf16.mxu0 0
    %1366 = vmatpush1.bf16.xpose.msra.mxu0 0
    %1367 = vmatprep.subr.bf16.mxu0 0
    %1368 = vmatpush1.bf16.xpose.msra.mxu0 0
    %1369 = vmatprep.subr.bf16.mxu0 0
    %1370 = vmatpush1.bf16.xpose.msra.mxu0 0
    %1371 = vmatprep.subr.bf16.mxu0 0
    %1372 = vmatpush1.bf16.xpose.msra.mxu0 0
    %1373 = vmatprep.subr.bf16.mxu0 0
    %1374 = vmatpush1.bf16.xpose.msra.mxu0 0
    %1375 = vmatprep.subr.bf16.mxu0 0
    %1376 = vmatpush1.bf16.xpose.msra.mxu0 0
    %1377 = vmatprep.subr.bf16.mxu0 0
    %1378 = vmatpush1.bf16.xpose.msra.mxu0 0
    %1379 = vmatprep.subr.bf16.mxu0 0
    %1380 = vmatpush1.bf16.xpose.msra.mxu0 0
    %1381 = vmatprep.subr.bf16.mxu0 0
    %1382 = vmatpush1.bf16.xpose.msra.mxu0 0
    %1383 = vmatprep.subr.bf16.mxu0 0
    %1384 = vmatpush1.bf16.xpose.msra.mxu0 0
    %1385 = vmatprep.subr.bf16.mxu0 0
    %1386 = vmatpush1.bf16.xpose.msra.mxu0 0
    %1387 = vmatprep.subr.bf16.mxu0 0
    %1388 = vmatpush1.bf16.xpose.msra.mxu0 0
    %1389 = vmatprep.subr.bf16.mxu0 0
    %1390 = vmatpush1.bf16.xpose.msra.mxu0 0
    %1391 = vmatprep.mubr.bf16.mxu0 0
    %1392 = vmatmul.mubr.bf16.gmra.mrb[0].mxu0 %v1354
    %v1393 = vpop.f32.mrb[0].mxu0
    %v1394 = vadd.f32 0.0, %v1393
    %v1395 = vpop.f32.mrb[0].mxu0
    %v1396 = vpop.f32.mrb[0].mxu0
    %v1397 = vadd.f32 0.0, %v1396
    %v1398 = vpop.f32.mrb[0].mxu0
    %1399 = vdwg.mxu0
    %v1400 = vmul.f32 %v1343, 0.25
    %v1401 = vmul.f32 %v1346, 0.25
    %v1402 = vmul.f32 %v1394, 0.25
    %v1403 = vmul.f32 %v1397, 0.25
    %v1404 = vsel %vm1056, %v1400, -inf
    %1405 = vmax.xlane.f32.xlu0 %v1404
    %v1406 = vpop.xlane.xlu0 %1405
    %v1407 = vsel %vm1056, %v1401, -inf
    %1408 = vmax.xlane.f32.xlu0 %v1407
    %v1409 = vpop.xlane.xlu0 %1408
    %v1410 = vsel %vm1056, %v1402, -inf
    %1411 = vmax.xlane.f32.xlu0 %v1410
    %v1412 = vpop.xlane.xlu0 %1411
    %v1413 = vsel %vm1056, %v1403, -inf
    %1414 = vmax.xlane.f32.xlu0 %v1413
    %v1415 = vpop.xlane.xlu0 %1414
    %v1416 = vsub.f32 %v1400, %v1406
    %v1417 = vsub.f32 %v1401, %v1409
    %v1418 = vsub.f32 %v1402, %v1412
    %v1419 = vsub.f32 %v1403, %v1415
    %v1420 = vmul.f32 %v1416, 1.442695
    %v1421 = vpow.pop %v1420
    %v1422 = vmul.f32 %v1417, 1.442695
    %v1423 = vpow.pop %v1422
    %v1424 = vmul.f32 %v1418, 1.442695
    %v1425 = vpow.pop %v1424
    %v1426 = vmul.f32 %v1419, 1.442695
    %v1427 = vpow.pop %v1426
    %v1428 = vsel %vm1056, %v1421, 0.0
    %1429 = vadd.xlane.f32.xlu0 %v1428
    %v1430 = vpop.xlane.xlu0 %1429
    %v1431 = vsel %vm1056, %v1423, 0.0
    %1432 = vadd.xlane.f32.xlu0 %v1431
    %v1433 = vpop.xlane.xlu0 %1432
    %v1434 = vsel %vm1056, %v1425, 0.0
    %1435 = vadd.xlane.f32.xlu0 %v1434
    %v1436 = vpop.xlane.xlu0 %1435
    %v1437 = vsel %vm1056, %v1427, 0.0
    %1438 = vadd.xlane.f32.xlu0 %v1437
    %v1439 = vpop.xlane.xlu0 %1438
    %v1440 = vrcp.pop %v1430
    %v1441 = vrcp.pop %v1433
    %v1442 = vrcp.pop %v1436
    %v1443 = vrcp.pop %v1439
    %v1444 = vmul.f32 %v1421, %v1440
    %v1445 = vmul.f32 %v1423, %v1441
    %v1446 = vmul.f32 %v1425, %v1442
    %v1447 = vmul.f32 %v1427, %v1443
    %v1448 = vpack.c.bf16 %v1445, %v1444
    %v1449 = vpack.c.bf16 %v1447, %v1446
    %1450 = vrot.lane.b32.xlu0 %v1051, 48
    %v1451 = vpop.permute.xlu0 %1450
    %v1454 = vsel %vm1056, %v1448, 0
    %1456 = vmatprep.subr.bf16.mxu0 0
    %1457 = vmatpush1.bf16.msra.mxu0 %v1451
    %1458 = vmatprep.subr.bf16.mxu0 0
    %1459 = vmatpush1.bf16.msra.mxu0 0
    %1460 = vmatprep.subr.bf16.mxu0 0
    %1461 = vmatpush1.bf16.msra.mxu0 0
    %1462 = vmatprep.subr.bf16.mxu0 0
    %1463 = vmatpush1.bf16.msra.mxu0 0
    %1464 = vmatprep.subr.bf16.mxu0 0
    %1465 = vmatpush1.bf16.msra.mxu0 0
    %1466 = vmatprep.subr.bf16.mxu0 0
    %1467 = vmatpush1.bf16.msra.mxu0 0
    %1468 = vmatprep.subr.bf16.mxu0 0
    %1469 = vmatpush1.bf16.msra.mxu0 0
    %1470 = vmatprep.subr.bf16.mxu0 0
    %1471 = vmatpush1.bf16.msra.mxu0 0
    %1472 = vmatprep.subr.bf16.mxu0 0
    %1473 = vmatpush1.bf16.msra.mxu0 0
    %1474 = vmatprep.subr.bf16.mxu0 0
    %1475 = vmatpush1.bf16.msra.mxu0 0
    %1476 = vmatprep.subr.bf16.mxu0 0
    %1477 = vmatpush1.bf16.msra.mxu0 0
    %1478 = vmatprep.subr.bf16.mxu0 0
    %1479 = vmatpush1.bf16.msra.mxu0 0
    %1480 = vmatprep.subr.bf16.mxu0 0
    %1481 = vmatpush1.bf16.msra.mxu0 0
    %1482 = vmatprep.subr.bf16.mxu0 0
    %1483 = vmatpush1.bf16.msra.mxu0 0
    %1484 = vmatprep.subr.bf16.mxu0 0
    %1485 = vmatpush1.bf16.msra.mxu0 0
    %1486 = vmatprep.subr.bf16.mxu0 0
    %1487 = vmatpush1.bf16.msra.mxu0 0
    %1488 = vmatprep.mubr.bf16.mxu0 0
    %1489 = vmatmul.mubr.bf16.gmra.mrb[0].mxu0 %v1454
    %v1490 = vpop.f32.mrb[0].mxu0
    %v1491 = vadd.f32 0.0, %v1490
    %v1492 = vpop.f32.mrb[0].mxu0
    %v1493 = vpop.f32.mrb[0].mxu0
    %v1494 = vadd.f32 0.0, %v1493
    %v1495 = vpop.f32.mrb[0].mxu0
    %1496 = vdwg.mxu0
    %1497 = vrot.lane.b32.xlu0 %v1052, 48
    %v1498 = vpop.permute.xlu0 %1497
    %v1501 = vsel %vm1056, %v1449, 0
    %1503 = vmatprep.subr.bf16.mxu0 0
    %1504 = vmatpush1.bf16.msra.mxu0 %v1498
    %1505 = vmatprep.subr.bf16.mxu0 0
    %1506 = vmatpush1.bf16.msra.mxu0 0
    %1507 = vmatprep.subr.bf16.mxu0 0
    %1508 = vmatpush1.bf16.msra.mxu0 0
    %1509 = vmatprep.subr.bf16.mxu0 0
    %1510 = vmatpush1.bf16.msra.mxu0 0
    %1511 = vmatprep.subr.bf16.mxu0 0
    %1512 = vmatpush1.bf16.msra.mxu0 0
    %1513 = vmatprep.subr.bf16.mxu0 0
    %1514 = vmatpush1.bf16.msra.mxu0 0
    %1515 = vmatprep.subr.bf16.mxu0 0
    %1516 = vmatpush1.bf16.msra.mxu0 0
    %1517 = vmatprep.subr.bf16.mxu0 0
    %1518 = vmatpush1.bf16.msra.mxu0 0
    %1519 = vmatprep.subr.bf16.mxu0 0
    %1520 = vmatpush1.bf16.msra.mxu0 0
    %1521 = vmatprep.subr.bf16.mxu0 0
    %1522 = vmatpush1.bf16.msra.mxu0 0
    %1523 = vmatprep.subr.bf16.mxu0 0
    %1524 = vmatpush1.bf16.msra.mxu0 0
    %1525 = vmatprep.subr.bf16.mxu0 0
    %1526 = vmatpush1.bf16.msra.mxu0 0
    %1527 = vmatprep.subr.bf16.mxu0 0
    %1528 = vmatpush1.bf16.msra.mxu0 0
    %1529 = vmatprep.subr.bf16.mxu0 0
    %1530 = vmatpush1.bf16.msra.mxu0 0
    %1531 = vmatprep.subr.bf16.mxu0 0
    %1532 = vmatpush1.bf16.msra.mxu0 0
    %1533 = vmatprep.subr.bf16.mxu0 0
    %1534 = vmatpush1.bf16.msra.mxu0 0
    %1535 = vmatprep.mubr.bf16.mxu0 0
    %1536 = vmatmul.mubr.bf16.gmra.mrb[0].mxu0 %v1501
    %v1537 = vpop.f32.mrb[0].mxu0
    %v1538 = vadd.f32 0.0, %v1537
    %v1539 = vpop.f32.mrb[0].mxu0
    %v1540 = vpop.f32.mrb[0].mxu0
    %v1541 = vadd.f32 0.0, %v1540
    %v1542 = vpop.f32.mrb[0].mxu0
    %1543 = vdwg.mxu0
    %1548 = vrot.lane.b32.xlu0 %v1491, 16
    %v1549 = vpop.permute.xlu0 %1548
    %1550 = vrot.lane.b32.xlu0 %v1494, 16
    %v1551 = vpop.permute.xlu0 %1550
    %1552 = vrot.lane.b32.xlu0 %v1538, 16
    %v1553 = vpop.permute.xlu0 %1552
    %1554 = vrot.lane.b32.xlu0 %v1541, 16
    %v1555 = vpop.permute.xlu0 %1554
    %v1560 = vsel %vm1056, %v1245, %v1549
    %v1561 = vsel %vm1056, %v1248, %v1551
    %v1562 = vsel %vm1056, %v1292, %v1553
    %v1563 = vsel %vm1056, %v1295, %v1555
    %v1564 = vld [vmem:[%s33] sm:$0xff]
    %v1565 = vld [vmem:[%s33 + $0x8] sm:$0xff]
    %v1566 = vld [vmem:[%s33 + $0x10] sm:$0xff]
    %v1567 = vld [vmem:[%s33 + $0x18] sm:$0xff]
    %v1568 = vpack.c.bf16 %v1561, %v1560
    %v1569 = vpack.c.bf16 %v1563, %v1562
    %v1570 = vpack.c.bf16 %v1565, %v1564
    %v1571 = vpack.c.bf16 %v1567, %v1566
    %v1573 = vsel %vm488, %v1568, 0
    %v1576 = vsel %vm488, %v1569, 0
    %1578 = vmatprep.subr.bf16.mxu0 0
    %1579 = vmatpush1.bf16.msra.mxu0 %v1570
    %1580 = vmatprep.subr.bf16.mxu0 0
    %1581 = vmatpush1.bf16.msra.mxu0 %v1571
    %1582 = vmatprep.subr.bf16.mxu0 0
    %1583 = vmatpush1.bf16.msra.mxu0 0
    %1584 = vmatprep.subr.bf16.mxu0 0
    %1585 = vmatpush1.bf16.msra.mxu0 0
    %1586 = vmatprep.subr.bf16.mxu0 0
    %1587 = vmatpush1.bf16.msra.mxu0 0
    %1588 = vmatprep.subr.bf16.mxu0 0
    %1589 = vmatpush1.bf16.msra.mxu0 0
    %1590 = vmatprep.subr.bf16.mxu0 0
    %1591 = vmatpush1.bf16.msra.mxu0 0
    %1592 = vmatprep.subr.bf16.mxu0 0
    %1593 = vmatpush1.bf16.msra.mxu0 0
    %1594 = vmatprep.subr.bf16.mxu0 0
    %1595 = vmatpush1.bf16.msra.mxu0 0
    %1596 = vmatprep.subr.bf16.mxu0 0
    %1597 = vmatpush1.bf16.msra.mxu0 0
    %1598 = vmatprep.subr.bf16.mxu0 0
    %1599 = vmatpush1.bf16.msra.mxu0 0
    %1600 = vmatprep.subr.bf16.mxu0 0
    %1601 = vmatpush1.bf16.msra.mxu0 0
    %1602 = vmatprep.subr.bf16.mxu0 0
    %1603 = vmatpush1.bf16.msra.mxu0 0
    %1604 = vmatprep.subr.bf16.mxu0 0
    %1605 = vmatpush1.bf16.msra.mxu0 0
    %1606 = vmatprep.subr.bf16.mxu0 0
    %1607 = vmatpush1.bf16.msra.mxu0 0
    %1608 = vmatprep.subr.bf16.mxu0 0
    %1609 = vmatpush1.bf16.msra.mxu0 0
    %1610 = vmatprep.mubr.bf16.mxu0 0
    %1611 = vmatmul.mubr.bf16.gmra.mrb[0].mxu0 %v1573
    %v1612 = vpop.f32.mrb[0].mxu0
    %v1613 = vadd.f32 0.0, %v1612
    %v1614 = vpop.f32.mrb[0].mxu0
    %v1615 = vpop.f32.mrb[0].mxu0
    %v1616 = vadd.f32 0.0, %v1615
    %v1617 = vpop.f32.mrb[0].mxu0
    %1618 = vmatprep.mubr.bf16.mxu0 0
    %1619 = vmatmul.mubr.bf16.gmra.mrb[0].mxu0 %v1576
    %v1620 = vpop.f32.mrb[0].mxu0
    %v1621 = vadd.f32 0.0, %v1620
    %v1622 = vpop.f32.mrb[0].mxu0
    %v1623 = vpop.f32.mrb[0].mxu0
    %v1624 = vadd.f32 0.0, %v1623
    %v1625 = vpop.f32.mrb[0].mxu0
    %1626 = vdwg.mxu0
    %v1627 = vadd.f32 %v977, %v1613
    %v1628 = vadd.f32 %v978, %v1616
    %v1629 = vadd.f32 %v979, %v1621
    %v1630 = vadd.f32 %v980, %v1624
    %v1631 = vld [vmem:[#allocation12] sm:$0x1]
    %v1633 = vlaneseq
    %v1634 = vshrl.u32 %v1633, 7
    %v1635 = vsub.s32 0, %v1634
    %v1636 = vrot.slane %v1631, %v1635
    %v1638 = vadd.f32 %v1627, %v1636
    %v1639 = vadd.f32 %v1628, %v1636
    %v1640 = vadd.f32 %v1629, %v1636
    %v1641 = vadd.f32 %v1630, %v1636
    %v1642 = vld [vmem:[%s37] sm:$0xff]
    %v1643 = vld [vmem:[%s37 + $0x8] sm:$0xff]
    %v1644 = vld [vmem:[%s37 + $0x10] sm:$0xff]
    %v1645 = vld [vmem:[%s37 + $0x18] sm:$0xff]
    %v1646 = vpack.c.bf16 %v1639, %v1638
    %v1647 = vpack.c.bf16 %v1641, %v1640
    %v1648 = vpack.c.bf16 %v1643, %v1642
    %v1649 = vpack.c.bf16 %v1645, %v1644
    %v1650 = vld [vmem:[#allocation14] sm:$0x1]
    %v1652 = vlaneseq
    %v1653 = vshrl.u32 %v1652, 7
    %v1654 = vsub.s32 0, %v1653
    %v1655 = vrot.slane %v1650, %v1654
    %v1658 = vsel %vm488, %v1646, 0
    %v1661 = vsel %vm488, %v1647, 0
    %1663 = vmatprep.subr.bf16.mxu0 0
    %1664 = vmatpush1.bf16.msra.mxu0 %v1648
    %1665 = vmatprep.subr.bf16.mxu0 0
    %1666 = vmatpush1.bf16.msra.mxu0 %v1649
    %1667 = vmatprep.subr.bf16.mxu0 0
    %1668 = vmatpush1.bf16.msra.mxu0 0
    %1669 = vmatprep.subr.bf16.mxu0 0
    %1670 = vmatpush1.bf16.msra.mxu0 0
    %1671 = vmatprep.subr.bf16.mxu0 0
    %1672 = vmatpush1.bf16.msra.mxu0 0
    %1673 = vmatprep.subr.bf16.mxu0 0
    %1674 = vmatpush1.bf16.msra.mxu0 0
    %1675 = vmatprep.subr.bf16.mxu0 0
    %1676 = vmatpush1.bf16.msra.mxu0 0
    %1677 = vmatprep.subr.bf16.mxu0 0
    %1678 = vmatpush1.bf16.msra.mxu0 0
    %1679 = vmatprep.subr.bf16.mxu0 0
    %1680 = vmatpush1.bf16.msra.mxu0 0
    %1681 = vmatprep.subr.bf16.mxu0 0
    %1682 = vmatpush1.bf16.msra.mxu0 0
    %1683 = vmatprep.subr.bf16.mxu0 0
    %1684 = vmatpush1.bf16.msra.mxu0 0
    %1685 = vmatprep.subr.bf16.mxu0 0
    %1686 = vmatpush1.bf16.msra.mxu0 0
    %1687 = vmatprep.subr.bf16.mxu0 0
    %1688 = vmatpush1.bf16.msra.mxu0 0
    %1689 = vmatprep.subr.bf16.mxu0 0
    %1690 = vmatpush1.bf16.msra.mxu0 0
    %1691 = vmatprep.subr.bf16.mxu0 0
    %1692 = vmatpush1.bf16.msra.mxu0 0
    %1693 = vmatprep.subr.bf16.mxu0 0
    %1694 = vmatpush1.bf16.msra.mxu0 0
    %1695 = vmatprep.mubr.bf16.mxu0 0
    %1696 = vmatmul.mubr.bf16.gmra.mrb[0].mxu0 %v1658
    %v1697 = vpop.f32.mrb[0].mxu0
    %v1698 = vadd.f32 %v1655, %v1697
    %v1699 = vpop.f32.mrb[0].mxu0
    %v1700 = vpop.f32.mrb[0].mxu0
    %v1701 = vadd.f32 %v1655, %v1700
    %v1702 = vpop.f32.mrb[0].mxu0
    %1703 = vmatprep.mubr.bf16.mxu0 0
    %1704 = vmatmul.mubr.bf16.gmra.mrb[0].mxu0 %v1661
    %v1705 = vpop.f32.mrb[0].mxu0
    %v1706 = vadd.f32 %v1655, %v1705
    %v1707 = vpop.f32.mrb[0].mxu0
    %v1708 = vpop.f32.mrb[0].mxu0
    %v1709 = vadd.f32 %v1655, %v1708
    %v1710 = vpop.f32.mrb[0].mxu0
    %1711 = vdwg.mxu0
    %v1712 = vmax.f32 %v1698, 0.0
    %v1713 = vmax.f32 %v1701, 0.0
    %v1714 = vmax.f32 %v1706, 0.0
    %v1715 = vmax.f32 %v1709, 0.0
    %v1716 = vld [vmem:[%s41] sm:$0xff]
    %v1717 = vld [vmem:[%s41 + $0x8] sm:$0xff]
    %v1718 = vld [vmem:[%s41 + $0x10] sm:$0xff]
    %v1719 = vld [vmem:[%s41 + $0x18] sm:$0xff]
    %v1720 = vld [vmem:[%s41 + $0x20] sm:$0xff]
    %v1721 = vld [vmem:[%s41 + $0x28] sm:$0xff]
    %v1722 = vld [vmem:[%s41 + $0x30] sm:$0xff]
    %v1723 = vld [vmem:[%s41 + $0x38] sm:$0xff]
    %v1724 = vpack.c.bf16 %v1713, %v1712
    %v1725 = vpack.c.bf16 %v1715, %v1714
    %v1726 = vpack.c.bf16 %v1717, %v1716
    %v1727 = vpack.c.bf16 %v1719, %v1718
    %v1728 = vpack.c.bf16 %v1721, %v1720
    %v1729 = vpack.c.bf16 %v1723, %v1722
    %v1731 = vsel %vm317, %v1724, 0
    %v1734 = vsel %vm317, %v1725, 0
    %1736 = vmatprep.subr.bf16.mxu0 0
    %1737 = vmatpush1.bf16.msra.mxu0 %v1726
    %1738 = vmatprep.subr.bf16.mxu0 0
    %1739 = vmatpush1.bf16.msra.mxu0 %v1727
    %1740 = vmatprep.subr.bf16.mxu0 0
    %1741 = vmatpush1.bf16.msra.mxu0 %v1728
    %1742 = vmatprep.subr.bf16.mxu0 0
    %1743 = vmatpush1.bf16.msra.mxu0 %v1729
    %1744 = vmatprep.subr.bf16.mxu0 0
    %1745 = vmatpush1.bf16.msra.mxu0 0
    %1746 = vmatprep.subr.bf16.mxu0 0
    %1747 = vmatpush1.bf16.msra.mxu0 0
    %1748 = vmatprep.subr.bf16.mxu0 0
    %1749 = vmatpush1.bf16.msra.mxu0 0
    %1750 = vmatprep.subr.bf16.mxu0 0
    %1751 = vmatpush1.bf16.msra.mxu0 0
    %1752 = vmatprep.subr.bf16.mxu0 0
    %1753 = vmatpush1.bf16.msra.mxu0 0
    %1754 = vmatprep.subr.bf16.mxu0 0
    %1755 = vmatpush1.bf16.msra.mxu0 0
    %1756 = vmatprep.subr.bf16.mxu0 0
    %1757 = vmatpush1.bf16.msra.mxu0 0
    %1758 = vmatprep.subr.bf16.mxu0 0
    %1759 = vmatpush1.bf16.msra.mxu0 0
    %1760 = vmatprep.subr.bf16.mxu0 0
    %1761 = vmatpush1.bf16.msra.mxu0 0
    %1762 = vmatprep.subr.bf16.mxu0 0
    %1763 = vmatpush1.bf16.msra.mxu0 0
    %1764 = vmatprep.subr.bf16.mxu0 0
    %1765 = vmatpush1.bf16.msra.mxu0 0
    %1766 = vmatprep.subr.bf16.mxu0 0
    %1767 = vmatpush1.bf16.msra.mxu0 0
    %1768 = vmatprep.mubr.bf16.mxu0 0
    %1769 = vmatmul.mubr.bf16.gmra.mrb[0].mxu0 %v1731
    %v1770 = vpop.f32.mrb[0].mxu0
    %v1771 = vadd.f32 0.0, %v1770
    %v1772 = vpop.f32.mrb[0].mxu0
    %v1773 = vpop.f32.mrb[0].mxu0
    %v1774 = vadd.f32 0.0, %v1773
    %v1775 = vpop.f32.mrb[0].mxu0
    %1776 = vmatprep.mubr.bf16.mxu0 0
    %1777 = vmatmul.mubr.bf16.gmra.mrb[0].mxu0 %v1734
    %v1778 = vpop.f32.mrb[0].mxu0
    %v1779 = vadd.f32 0.0, %v1778
    %v1780 = vpop.f32.mrb[0].mxu0
    %v1781 = vpop.f32.mrb[0].mxu0
    %v1782 = vadd.f32 0.0, %v1781
    %v1783 = vpop.f32.mrb[0].mxu0
    %1784 = vdwg.mxu0
    %v1785 = vadd.f32 %v1638, %v1771
    %v1786 = vadd.f32 %v1639, %v1774
    %v1787 = vadd.f32 %v1640, %v1779
    %v1788 = vadd.f32 %v1641, %v1782
    %v1789 = vld [vmem:[#allocation15] sm:$0x1]
    %v1791 = vlaneseq
    %v1792 = vshrl.u32 %v1791, 7
    %v1793 = vsub.s32 0, %v1792
    %v1794 = vrot.slane %v1789, %v1793
    %v1796 = vadd.f32 %v1785, %v1794
    %v1797 = vadd.f32 %v1786, %v1794
    %v1798 = vadd.f32 %v1787, %v1794
    %v1799 = vadd.f32 %v1788, %v1794
    %v1800 = vsel %vm488, %v1796, 0.0
    %1801 = vadd.xlane.f32.xlu0 %v1800
    %v1802 = vpop.xlane.xlu0 %1801
    %v1803 = vsel %vm488, %v1797, 0.0
    %1804 = vadd.xlane.f32.xlu0 %v1803
    %v1805 = vpop.xlane.xlu0 %1804
    %v1806 = vsel %vm488, %v1798, 0.0
    %1807 = vadd.xlane.f32.xlu0 %v1806
    %v1808 = vpop.xlane.xlu0 %1807
    %v1809 = vsel %vm488, %v1799, 0.0
    %1810 = vadd.xlane.f32.xlu0 %v1809
    %v1811 = vpop.xlane.xlu0 %1810
    %v1812 = vrcp.pop 32.0
    %v1813 = vmul.f32 %v1802, %v1812
    %v1814 = vmul.f32 %v1805, %v1812
    %v1815 = vmul.f32 %v1808, %v1812
    %v1816 = vmul.f32 %v1811, %v1812
    %v1817 = vsub.f32 %v1796, %v1813
    %v1818 = vsub.f32 %v1797, %v1814
    %v1819 = vsub.f32 %v1798, %v1815
    %v1820 = vsub.f32 %v1799, %v1816
    %v1821 = vmul.f32 %v1817, %v1817
    %v1822 = vmul.f32 %v1818, %v1818
    %v1823 = vmul.f32 %v1819, %v1819
    %v1824 = vmul.f32 %v1820, %v1820
    %v1825 = vsel %vm488, %v1821, 0.0
    %1826 = vadd.xlane.f32.xlu0 %v1825
    %v1827 = vpop.xlane.xlu0 %1826
    %v1828 = vsel %vm488, %v1822, 0.0
    %1829 = vadd.xlane.f32.xlu0 %v1828
    %v1830 = vpop.xlane.xlu0 %1829
    %v1831 = vsel %vm488, %v1823, 0.0
    %1832 = vadd.xlane.f32.xlu0 %v1831
    %v1833 = vpop.xlane.xlu0 %1832
    %v1834 = vsel %vm488, %v1824, 0.0
    %1835 = vadd.xlane.f32.xlu0 %v1834
    %v1836 = vpop.xlane.xlu0 %1835
    %v1837 = vmul.f32 %v1827, %v1812
    %v1838 = vmul.f32 %v1830, %v1812
    %v1839 = vmul.f32 %v1833, %v1812
    %v1840 = vmul.f32 %v1836, %v1812
    %v1841 = vadd.f32 %v1837, 1e-05
    %v1842 = vadd.f32 %v1838, 1e-05
    %v1843 = vadd.f32 %v1839, 1e-05
    %v1844 = vadd.f32 %v1840, 1e-05
    %v1845 = vrsqrt.pop %v1841
    %v1846 = vrsqrt.pop %v1842
    %v1847 = vrsqrt.pop %v1843
    %v1848 = vrsqrt.pop %v1844
    %v1849 = vmul.f32 %v1817, %v1845
    %v1850 = vmul.f32 %v1818, %v1846
    %v1851 = vmul.f32 %v1819, %v1847
    %v1852 = vmul.f32 %v1820, %v1848
    %v1853 = vld [vmem:[#allocation17] sm:$0x1]
    %v1855 = vlaneseq
    %v1856 = vshrl.u32 %v1855, 7
    %v1857 = vsub.s32 0, %v1856
    %v1858 = vrot.slane %v1853, %v1857
    %v1860 = vmul.f32 %v1849, %v1858
    %v1861 = vmul.f32 %v1850, %v1858
    %v1862 = vmul.f32 %v1851, %v1858
    %v1863 = vmul.f32 %v1852, %v1858
    %v1864 = vld [vmem:[#allocation18] sm:$0x1]
    %v1866 = vlaneseq
    %v1867 = vshrl.u32 %v1866, 7
    %v1868 = vsub.s32 0, %v1867
    %v1869 = vrot.slane %v1864, %v1868
    %v1871 = vadd.f32 %v1860, %v1869
    %v1872 = vadd.f32 %v1861, %v1869
    %v1873 = vadd.f32 %v1862, %v1869
    %v1874 = vadd.f32 %v1863, %v1869
    %v1875 = vld [vmem:[%s49] sm:$0xff]
    %v1876 = vld [vmem:[%s49 + $0x8] sm:$0xff]
    %v1877 = vld [vmem:[%s49 + $0x10] sm:$0xff]
    %v1878 = vld [vmem:[%s49 + $0x18] sm:$0xff]
    %v1879 = vpack.c.bf16 %v1872, %v1871
    %v1880 = vpack.c.bf16 %v1874, %v1873
    %v1881 = vpack.c.bf16 %v1876, %v1875
    %v1882 = vpack.c.bf16 %v1878, %v1877
    %v1883 = vld [vmem:[#allocation20] sm:$0x1]
    %v1885 = vlaneseq
    %v1886 = vshrl.u32 %v1885, 7
    %v1887 = vsub.s32 0, %v1886
    %v1888 = vrot.slane %v1883, %v1887
    %v1891 = vsel %vm488, %v1879, 0
    %v1894 = vsel %vm488, %v1880, 0
    %1896 = vmatprep.subr.bf16.mxu0 0
    %1897 = vmatpush1.bf16.msra.mxu0 %v1881
    %1898 = vmatprep.subr.bf16.mxu0 0
    %1899 = vmatpush1.bf16.msra.mxu0 %v1882
    %1900 = vmatprep.subr.bf16.mxu0 0
    %1901 = vmatpush1.bf16.msra.mxu0 0
    %1902 = vmatprep.subr.bf16.mxu0 0
    %1903 = vmatpush1.bf16.msra.mxu0 0
    %1904 = vmatprep.subr.bf16.mxu0 0
    %1905 = vmatpush1.bf16.msra.mxu0 0
    %1906 = vmatprep.subr.bf16.mxu0 0
    %1907 = vmatpush1.bf16.msra.mxu0 0
    %1908 = vmatprep.subr.bf16.mxu0 0
    %1909 = vmatpush1.bf16.msra.mxu0 0
    %1910 = vmatprep.subr.bf16.mxu0 0
    %1911 = vmatpush1.bf16.msra.mxu0 0
    %1912 = vmatprep.subr.bf16.mxu0 0
    %1913 = vmatpush1.bf16.msra.mxu0 0
    %1914 = vmatprep.subr.bf16.mxu0 0
    %1915 = vmatpush1.bf16.msra.mxu0 0
    %1916 = vmatprep.subr.bf16.mxu0 0
    %1917 = vmatpush1.bf16.msra.mxu0 0
    %1918 = vmatprep.subr.bf16.mxu0 0
    %1919 = vmatpush1.bf16.msra.mxu0 0
    %1920 = vmatprep.subr.bf16.mxu0 0
    %1921 = vmatpush1.bf16.msra.mxu0 0
    %1922 = vmatprep.subr.bf16.mxu0 0
    %1923 = vmatpush1.bf16.msra.mxu0 0
    %1924 = vmatprep.subr.bf16.mxu0 0
    %1925 = vmatpush1.bf16.msra.mxu0 0
    %1926 = vmatprep.subr.bf16.mxu0 0
    %1927 = vmatpush1.bf16.msra.mxu0 0
    %1928 = vmatprep.mubr.bf16.mxu0 0
    %1929 = vmatmul.mubr.bf16.gmra.mrb[0].mxu0 %v1891
    %v1930 = vpop.f32.mrb[0].mxu0
    %v1931 = vadd.f32 %v1888, %v1930
    %v1932 = vpop.f32.mrb[0].mxu0
    %v1933 = vpop.f32.mrb[0].mxu0
    %v1934 = vadd.f32 %v1888, %v1933
    %v1935 = vpop.f32.mrb[0].mxu0
    %1936 = vmatprep.mubr.bf16.mxu0 0
    %1937 = vmatmul.mubr.bf16.gmra.mrb[0].mxu0 %v1894
    %v1938 = vpop.f32.mrb[0].mxu0
    %v1939 = vadd.f32 %v1888, %v1938
    %v1940 = vpop.f32.mrb[0].mxu0
    %v1941 = vpop.f32.mrb[0].mxu0
    %v1942 = vadd.f32 %v1888, %v1941
    %v1943 = vpop.f32.mrb[0].mxu0
    %1944 = vdwg.mxu0
    %v1945 = vxor.u32 %v1931, 2147483648
    %v1946 = vxor.u32 %v1934, 2147483648
    %v1947 = vxor.u32 %v1939, 2147483648
    %v1948 = vxor.u32 %v1942, 2147483648
    %v1949 = vmul.f32 %v1945, 1.442695
    %v1950 = vpow.pop %v1949
    %v1951 = vmul.f32 %v1946, 1.442695
    %v1952 = vpow.pop %v1951
    %v1953 = vmul.f32 %v1947, 1.442695
    %v1954 = vpow.pop %v1953
    %v1955 = vmul.f32 %v1948, 1.442695
    %v1956 = vpow.pop %v1955
    %v1957 = vadd.f32 %v1950, 1.0
    %v1958 = vadd.f32 %v1952, 1.0
    %v1959 = vadd.f32 %v1954, 1.0
    %v1960 = vadd.f32 %v1956, 1.0
    %v1961 = vrcp.pop %v1957
    %v1962 = vmul.f32 1.0, %v1961
    %v1963 = vrcp.pop %v1958
    %v1964 = vmul.f32 1.0, %v1963
    %v1965 = vrcp.pop %v1959
    %v1966 = vmul.f32 1.0, %v1965
    %v1967 = vrcp.pop %v1960
    %v1968 = vmul.f32 1.0, %v1967
    %v1969 = vmul.f32 %v1871, %v1962
    %v1970 = vmul.f32 %v1872, %v1964
    %v1971 = vmul.f32 %v1873, %v1966
    %v1972 = vmul.f32 %v1874, %v1968
    %v1973 = vadd.f32 %v1871, %v1969
    %v1974 = vadd.f32 %v1872, %v1970
    %v1975 = vadd.f32 %v1873, %v1971
    %v1976 = vadd.f32 %v1874, %v1972
    %v1977 = vld [vmem:[#allocation21] sm:$0xff]
    %v1978 = vld [vmem:[#allocation21 + $0x8] sm:$0xff]
    %v1979 = vld [vmem:[#allocation21 + $0x10] sm:$0xff]
    %v1980 = vld [vmem:[#allocation21 + $0x18] sm:$0xff]
    %v1981 = vpack.c.bf16 %v1974, %v1973
    %v1982 = vpack.c.bf16 %v1976, %v1975
    %v1983 = vpack.c.bf16 %v1978, %v1977
    %v1984 = vpack.c.bf16 %v1980, %v1979
    %v1985 = vld [vmem:[#allocation23] sm:$0x1]
    %v1987 = vlaneseq
    %v1988 = vshrl.u32 %v1987, 7
    %v1989 = vsub.s32 0, %v1988
    %v1990 = vrot.slane %v1985, %v1989
    %v1993 = vsel %vm488, %v1981, 0
    %v1996 = vsel %vm488, %v1982, 0
    %1998 = vmatprep.subr.bf16.mxu0 0
    %1999 = vmatpush1.bf16.msra.mxu0 %v1983
    %2000 = vmatprep.subr.bf16.mxu0 0
    %2001 = vmatpush1.bf16.msra.mxu0 %v1984
    %2002 = vmatprep.subr.bf16.mxu0 0
    %2003 = vmatpush1.bf16.msra.mxu0 0
    %2004 = vmatprep.subr.bf16.mxu0 0
    %2005 = vmatpush1.bf16.msra.mxu0 0
    %2006 = vmatprep.subr.bf16.mxu0 0
    %2007 = vmatpush1.bf16.msra.mxu0 0
    %2008 = vmatprep.subr.bf16.mxu0 0
    %2009 = vmatpush1.bf16.msra.mxu0 0
    %2010 = vmatprep.subr.bf16.mxu0 0
    %2011 = vmatpush1.bf16.msra.mxu0 0
    %2012 = vmatprep.subr.bf16.mxu0 0
    %2013 = vmatpush1.bf16.msra.mxu0 0
    %2014 = vmatprep.subr.bf16.mxu0 0
    %2015 = vmatpush1.bf16.msra.mxu0 0
    %2016 = vmatprep.subr.bf16.mxu0 0
    %2017 = vmatpush1.bf16.msra.mxu0 0
    %2018 = vmatprep.subr.bf16.mxu0 0
    %2019 = vmatpush1.bf16.msra.mxu0 0
    %2020 = vmatprep.subr.bf16.mxu0 0
    %2021 = vmatpush1.bf16.msra.mxu0 0
    %2022 = vmatprep.subr.bf16.mxu0 0
    %2023 = vmatpush1.bf16.msra.mxu0 0
    %2024 = vmatprep.subr.bf16.mxu0 0
    %2025 = vmatpush1.bf16.msra.mxu0 0
    %2026 = vmatprep.subr.bf16.mxu0 0
    %2027 = vmatpush1.bf16.msra.mxu0 0
    %2028 = vmatprep.subr.bf16.mxu0 0
    %2029 = vmatpush1.bf16.msra.mxu0 0
    %2030 = vmatprep.mubr.bf16.mxu0 0
    %2031 = vmatmul.mubr.bf16.gmra.mrb[0].mxu0 %v1993
    %v2032 = vpop.f32.mrb[0].mxu0
    %v2033 = vadd.f32 %v1990, %v2032
    %v2034 = vpop.f32.mrb[0].mxu0
    %v2035 = vpop.f32.mrb[0].mxu0
    %v2036 = vadd.f32 %v1990, %v2035
    %v2037 = vpop.f32.mrb[0].mxu0
    %2038 = vmatprep.mubr.bf16.mxu0 0
    %2039 = vmatmul.mubr.bf16.gmra.mrb[0].mxu0 %v1996
    %v2040 = vpop.f32.mrb[0].mxu0
    %v2041 = vadd.f32 %v1990, %v2040
    %v2042 = vpop.f32.mrb[0].mxu0
    %v2043 = vpop.f32.mrb[0].mxu0
    %v2044 = vadd.f32 %v1990, %v2043
    %v2045 = vpop.f32.mrb[0].mxu0
    %2046 = vdwg.mxu0
    %v2047 = vtanh.pop %v2033
    %v2048 = vtanh.pop %v2036
    %v2049 = vtanh.pop %v2041
    %v2050 = vtanh.pop %v2044
    %v2051 = vld [vmem:[#allocation24] sm:$0x1]
    %v2053 = vlaneseq
    %v2054 = vshrl.u32 %v2053, 7
    %v2055 = vsub.s32 0, %v2054
    %v2056 = vrot.slane %v2051, %v2055
    %v2058 = vmul.f32 %v2047, %v2056
    %v2059 = vmul.f32 %v2048, %v2056
    %v2060 = vmul.f32 %v2049, %v2056
    %v2061 = vmul.f32 %v2050, %v2056
    %v2062 = vsel %vm488, %v2058, 0.0
    %2063 = vadd.xlane.f32.xlu0 %v2062
    %v2064 = vpop.xlane.xlu0 %2063
    %v2065 = vsel %vm488, %v2059, 0.0
    %2066 = vadd.xlane.f32.xlu0 %v2065
    %v2067 = vpop.xlane.xlu0 %2066
    %v2068 = vsel %vm488, %v2060, 0.0
    %2069 = vadd.xlane.f32.xlu0 %v2068
    %v2070 = vpop.xlane.xlu0 %2069
    %v2071 = vsel %vm488, %v2061, 0.0
    %2072 = vadd.xlane.f32.xlu0 %v2071
    %v2073 = vpop.xlane.xlu0 %2072
    %v2074 = vld [vmem:[#allocation2] sm:$0x1]
    %v2076 = vlaneseq
    %v2077 = vshrl.u32 %v2076, 7
    %v2078 = vsub.s32 0, %v2077
    %v2079 = vrot.slane %v2074, %v2078
    %v2081 = vadd.f32 %v2064, %v2079
    %v2082 = vadd.f32 %v2067, %v2079
    %v2083 = vadd.f32 %v2070, %v2079
    %v2084 = vadd.f32 %v2073, %v2079
    %vm2085 = vcmask 7168
    %v2086 = vsel %vm2085, %v2081, -inf
    %v2087 = vsel %vm2085, %v2082, -inf
    %v2088 = vmax.f32 %v2086, %v2087
    %v2089 = vrot.slane %v2088, 4
    %v2090 = vmax.f32 %v2088, %v2089
    %v2091 = vrot.slane %v2090, 2
    %v2092 = vmax.f32 %v2090, %v2091
    %v2093 = vrot.slane %v2092, 1
    %v2094 = vmax.f32 %v2092, %v2093
    %v2095 = vsel %vm2085, %v2083, -inf
    %v2096 = vsel %vm2085, %v2084, -inf
    %v2097 = vmax.f32 %v2095, %v2096
    %v2098 = vrot.slane %v2097, 4
    %v2099 = vmax.f32 %v2097, %v2098
    %v2100 = vrot.slane %v2099, 2
    %v2101 = vmax.f32 %v2099, %v2100
    %v2102 = vrot.slane %v2101, 1
    %v2103 = vmax.f32 %v2101, %v2102
    %v2104 = vsub.f32 %v2081, %v2094
    %v2105 = vsub.f32 %v2082, %v2094
    %v2106 = vsub.f32 %v2083, %v2103
    %v2107 = vsub.f32 %v2084, %v2103
    %v2108 = vmul.f32 %v2104, 1.442695
    %v2109 = vpow.pop %v2108
    %v2110 = vmul.f32 %v2105, 1.442695
    %v2111 = vpow.pop %v2110
    %v2112 = vmul.f32 %v2106, 1.442695
    %v2113 = vpow.pop %v2112
    %v2114 = vmul.f32 %v2107, 1.442695
    %v2115 = vpow.pop %v2114
    %v2116 = vsel %vm2085, %v2109, 0.0
    %v2117 = vsel %vm2085, %v2111, 0.0
    %v2118 = vadd.f32 %v2116, %v2117
    %v2119 = vrot.slane %v2118, 4
    %v2120 = vadd.f32 %v2118, %v2119
    %v2121 = vrot.slane %v2120, 2
    %v2122 = vadd.f32 %v2120, %v2121
    %v2123 = vrot.slane %v2122, 1
    %v2124 = vadd.f32 %v2122, %v2123
    %v2125 = vsel %vm2085, %v2113, 0.0
    %v2126 = vsel %vm2085, %v2115, 0.0
    %v2127 = vadd.f32 %v2125, %v2126
    %v2128 = vrot.slane %v2127, 4
    %v2129 = vadd.f32 %v2127, %v2128
    %v2130 = vrot.slane %v2129, 2
    %v2131 = vadd.f32 %v2129, %v2130
    %v2132 = vrot.slane %v2131, 1
    %v2133 = vadd.f32 %v2131, %v2132
    %v2134 = vrcp.pop %v2124
    %v2135 = vrcp.pop %v2133
    %v2136 = vmul.f32 %v2109, %v2134
    %v2137 = vmul.f32 %v2111, %v2134
    %v2138 = vmul.f32 %v2113, %v2135
    %v2139 = vmul.f32 %v2115, %v2135
    %2141 = vset.pattern.permute.xlu0 0
    %2142 = vperm.xlu0 %2141, %v2136
    %v2143 = vpop.permute.xlu0 %2142
    %2146 = vset.pattern.permute.xlu0 0
    %2147 = vperm.xlu0 %2146, %v2137
    %v2148 = vpop.permute.xlu0 %2147
    %2151 = vset.pattern.permute.xlu0 0
    %2152 = vperm.xlu0 %2151, %v2138
    %v2153 = vpop.permute.xlu0 %2152
    %2156 = vset.pattern.permute.xlu0 0
    %2157 = vperm.xlu0 %2156, %v2139
    %v2158 = vpop.permute.xlu0 %2157
    %v2160 = vmul.f32 %v2143, %v1973
    %v2161 = vmul.f32 %v2148, %v1974
    %v2162 = vmul.f32 %v2153, %v1975
    %v2163 = vmul.f32 %v2158, %v1976
    %v2164 = vsel %vm488, %v2160, 0.0
    %v2165 = vsel %vm488, %v2161, 0.0
    %v2166 = vadd.f32 %v2164, %v2165
    %v2167 = vrot.slane %v2166, 4
    %v2168 = vadd.f32 %v2166, %v2167
    %v2169 = vrot.slane %v2168, 2
    %v2170 = vadd.f32 %v2168, %v2169
    %v2171 = vrot.slane %v2170, 1
    %v2172 = vadd.f32 %v2170, %v2171
    %v2173 = vsel %vm488, %v2162, 0.0
    %v2174 = vsel %vm488, %v2163, 0.0
    %v2175 = vadd.f32 %v2173, %v2174
    %v2176 = vrot.slane %v2175, 4
    %v2177 = vadd.f32 %v2175, %v2176
    %v2178 = vrot.slane %v2177, 2
    %v2179 = vadd.f32 %v2177, %v2178
    %v2180 = vrot.slane %v2179, 1
    %v2181 = vadd.f32 %v2179, %v2180
    %v2182 = vld [vmem:[%s61] sm:$0xff]
    %v2183 = vld [vmem:[%s61 + $0x8] sm:$0xff]
    %v2184 = vld [vmem:[%s61 + $0x10] sm:$0xff]
    %v2185 = vld [vmem:[%s61 + $0x18] sm:$0xff]
    %v2186 = vpack.c.bf16 %v2172, %v2172
    %v2187 = vpack.c.bf16 %v2181, %v2181
    %v2188 = vpack.c.bf16 %v2183, %v2182
    %v2189 = vpack.c.bf16 %v2185, %v2184
    %v2190 = vld [vmem:[#allocation26] sm:$0x1]
    %v2192 = vlaneseq
    %v2193 = vshrl.u32 %v2192, 7
    %v2194 = vsub.s32 0, %v2193
    %v2195 = vrot.slane %v2190, %v2194
    %v2199 = vunpack.c.l.b16 %v2186
    %v2200 = vunpack.c.l.b16 %v2187
    %vm2201 = vcmask 1041409
    %v2202 = vsel %vm2201, %v2200, %v2199
    %v2203 = vpack.c.b16 %v2202, %v2202
    %v2205 = vsel %vm488, %v2203, 0
    %2207 = vmatprep.subr.bf16.mxu0 0
    %2208 = vmatpush1.bf16.msra.mxu0 %v2188
    %2209 = vmatprep.subr.bf16.mxu0 0
    %2210 = vmatpush1.bf16.msra.mxu0 %v2189
    %2211 = vmatprep.subr.bf16.mxu0 0
    %2212 = vmatpush1.bf16.msra.mxu0 0
    %2213 = vmatprep.subr.bf16.mxu0 0
    %2214 = vmatpush1.bf16.msra.mxu0 0
    %2215 = vmatprep.subr.bf16.mxu0 0
    %2216 = vmatpush1.bf16.msra.mxu0 0
    %2217 = vmatprep.subr.bf16.mxu0 0
    %2218 = vmatpush1.bf16.msra.mxu0 0
    %2219 = vmatprep.subr.bf16.mxu0 0
    %2220 = vmatpush1.bf16.msra.mxu0 0
    %2221 = vmatprep.subr.bf16.mxu0 0
    %2222 = vmatpush1.bf16.msra.mxu0 0
    %2223 = vmatprep.subr.bf16.mxu0 0
    %2224 = vmatpush1.bf16.msra.mxu0 0
    %2225 = vmatprep.subr.bf16.mxu0 0
    %2226 = vmatpush1.bf16.msra.mxu0 0
    %2227 = vmatprep.subr.bf16.mxu0 0
    %2228 = vmatpush1.bf16.msra.mxu0 0
    %2229 = vmatprep.subr.bf16.mxu0 0
    %2230 = vmatpush1.bf16.msra.mxu0 0
    %2231 = vmatprep.subr.bf16.mxu0 0
    %2232 = vmatpush1.bf16.msra.mxu0 0
    %2233 = vmatprep.subr.bf16.mxu0 0
    %2234 = vmatpush1.bf16.msra.mxu0 0
    %2235 = vmatprep.subr.bf16.mxu0 0
    %2236 = vmatpush1.bf16.msra.mxu0 0
    %2237 = vmatprep.subr.bf16.mxu0 0
    %2238 = vmatpush1.bf16.msra.mxu0 0
    %2239 = vmatprep.mubr.bf16.mxu0 0
    %2240 = vmatmul.mubr.bf16.gmra.mrb[0].mxu0 %v2205
    %v2241 = vpop.f32.mrb[0].mxu0
    %v2242 = vadd.f32 %v2195, %v2241
    %v2243 = vpop.f32.mrb[0].mxu0
    %v2244 = vpop.f32.mrb[0].mxu0
    %v2245 = vpop.f32.mrb[0].mxu0
    %2246 = vdwg.mxu0
    %vm2247 = vcmask 74752
    %2248 = vst.msk [vmem:[#allocation27] sm:$0x3] %vm2247, %v2242
    // Predicated region
    $region190: #{forward.1} parent=1 // pred_check
      _
    $region191: #{forward.1} parent=1 // pred_check_branch
      %2250 = sbr.rel (0) target = $region193
    $region192: #{forward.1} parent=1 // pred_region
      %s2252 = ssub.s32 32, 32
      %2253 = vsyncadd [#allocation5], %s2252
      %s2255 = sshll.u32 [#allocation27], 4
      %s2256 = int_to_ptr.vmem [resolvable:$true] %s2255
      %2258 = dma.vmem_to_hbm [thread:$0]  %s2256, 32, %s65, [#allocation5]
    $region193: #{forward.1} parent=1 // pred_fallthru
      _
    // Predicated region
    $region194: #{forward.1} parent=1 // pred_check
      _
    $region195: #{forward.1} parent=1 // pred_check_branch
      %2260 = sbr.rel (0) target = $region197
    $region196: #{forward.1} parent=1 // pred_region
      %2261 = dma.done [#allocation5], 32
    $region197: #{forward.1} parent=1 // pred_fallthru
      _
    %2262 = vsyncpa [#allocation4], 1
    %2263 = vsyncpa [#allocation7], 1
    %2264 = vsyncpa [#allocation10], 1
    %2265 = vsyncpa [#allocation13], 1
    %2266 = vsyncpa [#allocation16], 1
    %2267 = vsyncpa [#allocation19], 1
    %2268 = vsyncpa [#allocation22], 1
    %2269 = vsyncpa [#allocation25], 1
    %2270 = vsyncpa [#allocation5], 1

</llo_original>
